<compile_context>
chip_gen: v7x
topology: tpu7x:2x2x1
jax: 0.10.0
libtpu: 0.0.40
codegen_flags: <defaults>
</compile_context>

<pallas_src>
import jax
import jax.numpy as jnp
from jax.experimental import pallas as pl
from jax.experimental.pallas import tpu as pltpu


# ----------------------------------------------------------------------------
# Kernel 1: conv1 (5x5, 1->10) + bias + 2x2 max-pool + ReLU   (one image/step)
# ----------------------------------------------------------------------------
def _conv1_pool_relu_kernel(p1_ref, w1_ref, b1_ref, o_ref):
    # p1_ref: [1, 4, 25, 144]  rows=(kh,kw), cols=(po*12+pw), leading dim = pooling tap
    # w1_ref: [10, 25], b1_ref: [10, 1], o_ref: [1, 10, 144]
    w1 = w1_ref[...]
    m = None
    for t in range(4):                                    # 4 pooling taps (dh, dw)
        c = jnp.dot(w1, p1_ref[0, t], preferred_element_type=jnp.float32)  # [10,144]
        m = c if m is None else jnp.maximum(m, c)
    # Per-channel bias is identical for all taps => add after the max; ReLU last.
    o_ref[0] = jnp.maximum(m + b1_ref[...], 0.0)


# ----------------------------------------------------------------------------
# Kernel 2: conv2 (5x5, 10->20) + bias + pool + ReLU + fc1 + ReLU + fc2
#           + log_softmax                                     (one image/step)
# ----------------------------------------------------------------------------
def _conv2_fc_head_kernel(p2_ref, w2_ref, b2_ref, fc1w_ref, fc1b_ref,
                          fc2w_ref, fc2b_ref, o_ref, flat_ref):
    # p2_ref: [1, 250, 64]  rows=(cin,kh,kw), cols = tap*16 + qo*4 + qw
    c2 = jnp.dot(w2_ref[...], p2_ref[0], preferred_element_type=jnp.float32)   # [20, 64]
    # max over the 4 pooling taps (contiguous 16-column blocks), bias, ReLU
    m = jnp.maximum(jnp.maximum(c2[:, 0:16], c2[:, 16:32]),
                    jnp.maximum(c2[:, 32:48], c2[:, 48:64]))                    # [20, 16]
    pooled = jnp.maximum(m + b2_ref[...], 0.0)                                  # [20, 16]
    # Flatten to [1, 320] in PyTorch view(-1, 320) order (c, h, w): 20 static
    # row -> lane-block stores into VMEM scratch (all 320 lanes overwritten).
    for c in range(20):
        flat_ref[0:1, c * 16:(c + 1) * 16] = pooled[c:c + 1, :]
    xf = flat_ref[...]                                                          # [1, 320]
    h1 = jnp.dot(xf, fc1w_ref[...], preferred_element_type=jnp.float32) + fc1b_ref[...]
    h1 = jnp.maximum(h1, 0.0)                                                   # [1, 50]
    logits = (jnp.dot(h1, fc2w_ref[...], preferred_element_type=jnp.float32)
              + fc2b_ref[...])                                                  # [1, 10]
    mx = jnp.max(logits, axis=-1, keepdims=True)
    lse = jnp.log(jnp.sum(jnp.exp(logits - mx), axis=-1, keepdims=True))
    o_ref[0] = logits - mx - lse                                                # [1, 10]


# ----------------------------------------------------------------------------
# Wrapper-side patch gathers (pure XLA data movement on tiny arrays)
# ----------------------------------------------------------------------------
def _conv1_pool_patches(x):
    """x: [B,1,28,28] -> [B,4,25,144].
    P[b, t=(dh,dw), kh*5+kw, po*12+pw] = x[b,0, 2po+dh+kh, 2pw+dw+kw]."""
    B = x.shape[0]
    x2 = x[:, 0].astype(jnp.float32)                       # [B, 28, 28]
    taps = []
    for dh in (0, 1):
        for dw in (0, 1):
            rows = []
            for kh in range(5):
                for kw in range(5):
                    win = x2[:, dh + kh::2, dw + kw::2][:, :12, :12]   # [B,12,12]
                    rows.append(win.reshape(B, 144))
            taps.append(jnp.stack(rows, axis=1))           # [B, 25, 144]
    return jnp.stack(taps, axis=1)                         # [B, 4, 25, 144]


def _conv2_pool_patches(pl1):
    """pl1: [B,10,144] (pooled conv1) -> [B,250,64].
    P[b, cin*25+kh*5+kw, t*16+qo*4+qw] = pl1[b, cin, 2qo+dh+kh, 2qw+dw+kw]."""
    B = pl1.shape[0]
    r = pl1.reshape(B, 10, 12, 12)
    cols = []
    for dh in (0, 1):
        for dw in (0, 1):
            for qo in range(4):
                for qw in range(4):
                    win = r[:, :, 2 * qo + dh:2 * qo + dh + 5,
                            2 * qw + dw:2 * qw + dw + 5]   # [B,10,5,5]
                    cols.append(win.reshape(B, 250))
    return jnp.stack(cols, axis=-1)                        # [B, 250, 64]


# ----------------------------------------------------------------------------
# pallas_call wrappers
# ----------------------------------------------------------------------------
def conv1_pool_relu(p1, w1f, b1):
    B = p1.shape[0]
    return pl.pallas_call(
        _conv1_pool_relu_kernel,
        out_shape=jax.ShapeDtypeStruct((B, 10, 144), jnp.float32),
        grid=(B,),
        in_specs=[
            pl.BlockSpec((1, 4, 25, 144), lambda b: (b, 0, 0, 0)),
            pl.BlockSpec((10, 25), lambda b: (0, 0)),       # weights: fetched once
            pl.BlockSpec((10, 1), lambda b: (0, 0)),
        ],
        out_specs=pl.BlockSpec((1, 10, 144), lambda b: (b, 0, 0)),
        compiler_params=pltpu.CompilerParams(dimension_semantics=("parallel",)),
    )(p1, w1f, b1)


def conv2_fc_head(p2, w2f, b2, fc1w, fc1b, fc2w, fc2b):
    B = p2.shape[0]
    out = pl.pallas_call(
        _conv2_fc_head_kernel,
        out_shape=jax.ShapeDtypeStruct((B, 1, 10), jnp.float32),
        grid=(B,),
        in_specs=[
            pl.BlockSpec((1, 250, 64), lambda b: (b, 0, 0)),
            pl.BlockSpec((20, 250), lambda b: (0, 0)),
            pl.BlockSpec((20, 1), lambda b: (0, 0)),
            pl.BlockSpec((320, 50), lambda b: (0, 0)),
            pl.BlockSpec((1, 50), lambda b: (0, 0)),
            pl.BlockSpec((50, 10), lambda b: (0, 0)),
            pl.BlockSpec((1, 10), lambda b: (0, 0)),
        ],
        out_specs=pl.BlockSpec((1, 1, 10), lambda b: (b, 0, 0)),
        scratch_shapes=[pltpu.VMEM((1, 320), jnp.float32)],
        compiler_params=pltpu.CompilerParams(dimension_semantics=("parallel",)),
    )(p2, w2f, b2, fc1w, fc1b, fc2w, fc2b)
    return out.reshape(B, 10)


# ----------------------------------------------------------------------------
# Full Net forward (inference)
# ----------------------------------------------------------------------------
def net_forward(x, params):
    # --- relu(max_pool2d(conv1(x), 2))  -> kernel 1
    p1 = _conv1_pool_patches(x)                                        # [B,4,25,144]
    w1f = params["w1"].reshape(10, 25).astype(jnp.float32)
    b1 = params["b1"].reshape(10, 1).astype(jnp.float32)
    pl1 = conv1_pool_relu(p1, w1f, b1)                                 # [B,10,144]
    # --- conv2 -> Dropout2d (eval: identity) -> pool -> relu -> view(-1,320)
    #     -> fc1 -> relu -> dropout (eval: identity) -> fc2 -> log_softmax
    #     all fused in kernel 2
    p2 = _conv2_pool_patches(pl1)                                      # [B,250,64]
    w2f = params["w2"].reshape(20, 250).astype(jnp.float32)
    b2 = params["b2"].reshape(20, 1).astype(jnp.float32)
    return conv2_fc_head(
        p2, w2f, b2,
        params["fc1_w"].astype(jnp.float32),
        params["fc1_b"].reshape(1, 50).astype(jnp.float32),
        params["fc2_w"].astype(jnp.float32),
        params["fc2_b"].reshape(1, 10).astype(jnp.float32))            # [B,10]


def init_params(key):
    ks = jax.random.split(key, 8)
    s = 0.05
    return {
        "w1": s * jax.random.normal(ks[0], (10, 1, 5, 5), jnp.float32),
        "b1": s * jax.random.normal(ks[1], (10,), jnp.float32),
        "w2": s * jax.random.normal(ks[2], (20, 10, 5, 5), jnp.float32),
        "b2": s * jax.random.normal(ks[3], (20,), jnp.float32),
        # stored as [in, out] so the kernel computes x @ W + b
        "fc1_w": s * jax.random.normal(ks[4], (320, 50), jnp.float32),
        "fc1_b": s * jax.random.normal(ks[5], (50,), jnp.float32),
        "fc2_w": s * jax.random.normal(ks[6], (50, 10), jnp.float32),
        "fc2_b": s * jax.random.normal(ks[7], (10,), jnp.float32),
    }


# Pure-JAX reference (same math, high precision) for a correctness check.
def _net_forward_ref(x, params):
    hi = jax.lax.Precision.HIGHEST

    def conv(xx, w, b):
        bsz, _, h, wd = xx.shape
        cout, _, k, _ = w.shape
        ho, wo = h - k + 1, wd - k + 1
        out = jnp.zeros((bsz, cout, ho, wo), jnp.float32)
        for kh in range(k):
            for kw in range(k):
                out = out + jnp.einsum("oc,bchw->bohw", w[:, :, kh, kw],
                                       xx[:, :, kh:kh + ho, kw:kw + wo],
                                       precision=hi)
        return out + b[None, :, None, None]

    def pool_relu(y):
        m = jnp.maximum(jnp.maximum(y[:, :, 0::2, 0::2], y[:, :, 0::2, 1::2]),
                        jnp.maximum(y[:, :, 1::2, 0::2], y[:, :, 1::2, 1::2]))
        return jnp.maximum(m, 0.0)

    h = pool_relu(conv(x, params["w1"], params["b1"]))
    h = pool_relu(conv(h, params["w2"], params["b2"]))
    h = h.reshape(h.shape[0], -1)
    h = jnp.maximum(jnp.dot(h, params["fc1_w"], precision=hi) + params["fc1_b"], 0.0)
    h = jnp.dot(h, params["fc2_w"], precision=hi) + params["fc2_b"]
    return jax.nn.log_softmax(h, axis=-1)


if __name__ == "__main__":
    key = jax.random.PRNGKey(0)
    k_x, k_p = jax.random.split(key)
    # MNIST-shaped input: batch=2, NCHW [2, 1, 28, 28] (28x28 is required for
    # the hard-coded 320-feature flatten in the original module).
    x = jax.random.normal(k_x, (2, 1, 28, 28), jnp.float32)
    params = init_params(k_p)

    out = jax.jit(net_forward)(x, params)
    out = jax.block_until_ready(out)

    assert out.shape == (2, 10), out.shape
    # log_softmax rows should exponentiate-and-sum to ~1
    assert jnp.allclose(jnp.sum(jnp.exp(out), axis=-1), 1.0, atol=1e-4)
    # match the pure-JAX reference
    ref = jax.jit(_net_forward_ref)(x, params)
    assert jnp.allclose(out, ref, atol=2e-3), float(jnp.max(jnp.abs(out - ref)))
    print("KERNEL_OK")
</pallas_src>

<mosaic_0001>
module attributes {stable_mosaic.version = 11 : i64} {
  func.func @_conv1_pool_relu_kernel(%arg0: i32, %arg1: memref<1x4x25x144xf32, #tpu.memory_space<vmem>>, %arg2: memref<10x25xf32, #tpu.memory_space<vmem>>, %arg3: memref<10x1xf32, #tpu.memory_space<vmem>>, %arg4: memref<1x10x144xf32, #tpu.memory_space<vmem>>) attributes {dimension_semantics = [#tpu.dimension_semantics<parallel>], iteration_bounds = array<i64: 2>, scalar_prefetch = 0 : i64, scratch_operands = 0 : i64, tpu.core_type = #tpu.core_type<tc>, window_params = [{transform_indices = @transform_0, window_bounds = array<i64: 1, 4, 25, 144>}, {pipeline_mode = #tpu.pipeline_mode<synchronous>, transform_indices = @transform_1, window_bounds = array<i64: 10, 25>}, {pipeline_mode = #tpu.pipeline_mode<synchronous>, transform_indices = @transform_2, window_bounds = array<i64: 10, 1>}, {transform_indices = @transform_3, window_bounds = array<i64: 1, 10, 144>}]} {
    %c0 = arith.constant 0 : index
    %c0_0 = arith.constant 0 : index
    %0 = vector.load %arg2[%c0, %c0_0] : memref<10x25xf32, #tpu.memory_space<vmem>>, vector<10x25xf32>
    %c0_1 = arith.constant 0 : index
    %c0_2 = arith.constant 0 : index
    %c0_3 = arith.constant 0 : index
    %c0_4 = arith.constant 0 : index
    %1 = vector.load %arg1[%c0_1, %c0_2, %c0_3, %c0_4] : memref<1x4x25x144xf32, #tpu.memory_space<vmem>>, vector<1x1x25x144xf32>
    %2 = vector.shape_cast %1 : vector<1x1x25x144xf32> to vector<25x144xf32>
    %cst = arith.constant dense<0.000000e+00> : vector<10x144xf32>
    %3 = tpu.matmul %0, %2, %cst {dimension_numbers = #tpu.dot_dimension_numbers<[1], [0], [0], [1], [0, 0, 1, 1], [], []>} : vector<10x25xf32>, vector<25x144xf32>, vector<10x144xf32> -> vector<10x144xf32>
    %c0_5 = arith.constant 0 : index
    %c1 = arith.constant 1 : index
    %c0_6 = arith.constant 0 : index
    %c0_7 = arith.constant 0 : index
    %4 = vector.load %arg1[%c0_5, %c1, %c0_6, %c0_7] : memref<1x4x25x144xf32, #tpu.memory_space<vmem>>, vector<1x1x25x144xf32>
    %5 = vector.shape_cast %4 : vector<1x1x25x144xf32> to vector<25x144xf32>
    %cst_8 = arith.constant dense<0.000000e+00> : vector<10x144xf32>
    %6 = tpu.matmul %0, %5, %cst_8 {dimension_numbers = #tpu.dot_dimension_numbers<[1], [0], [0], [1], [0, 0, 1, 1], [], []>} : vector<10x25xf32>, vector<25x144xf32>, vector<10x144xf32> -> vector<10x144xf32>
    %7 = arith.maximumf %3, %6 : vector<10x144xf32>
    %c0_9 = arith.constant 0 : index
    %c2 = arith.constant 2 : index
    %c0_10 = arith.constant 0 : index
    %c0_11 = arith.constant 0 : index
    %8 = vector.load %arg1[%c0_9, %c2, %c0_10, %c0_11] : memref<1x4x25x144xf32, #tpu.memory_space<vmem>>, vector<1x1x25x144xf32>
    %9 = vector.shape_cast %8 : vector<1x1x25x144xf32> to vector<25x144xf32>
    %cst_12 = arith.constant dense<0.000000e+00> : vector<10x144xf32>
    %10 = tpu.matmul %0, %9, %cst_12 {dimension_numbers = #tpu.dot_dimension_numbers<[1], [0], [0], [1], [0, 0, 1, 1], [], []>} : vector<10x25xf32>, vector<25x144xf32>, vector<10x144xf32> -> vector<10x144xf32>
    %11 = arith.maximumf %7, %10 : vector<10x144xf32>
    %c0_13 = arith.constant 0 : index
    %c3 = arith.constant 3 : index
    %c0_14 = arith.constant 0 : index
    %c0_15 = arith.constant 0 : index
    %12 = vector.load %arg1[%c0_13, %c3, %c0_14, %c0_15] : memref<1x4x25x144xf32, #tpu.memory_space<vmem>>, vector<1x1x25x144xf32>
    %13 = vector.shape_cast %12 : vector<1x1x25x144xf32> to vector<25x144xf32>
    %cst_16 = arith.constant dense<0.000000e+00> : vector<10x144xf32>
    %14 = tpu.matmul %0, %13, %cst_16 {dimension_numbers = #tpu.dot_dimension_numbers<[1], [0], [0], [1], [0, 0, 1, 1], [], []>} : vector<10x25xf32>, vector<25x144xf32>, vector<10x144xf32> -> vector<10x144xf32>
    %15 = arith.maximumf %11, %14 : vector<10x144xf32>
    %c0_17 = arith.constant 0 : index
    %c0_18 = arith.constant 0 : index
    %16 = vector.load %arg3[%c0_17, %c0_18] : memref<10x1xf32, #tpu.memory_space<vmem>>, vector<10x1xf32>
    %17 = vector.broadcast %16 : vector<10x1xf32> to vector<10x144xf32>
    %18 = arith.addf %15, %17 : vector<10x144xf32>
    %cst_19 = arith.constant 0.000000e+00 : f32
    %19 = vector.broadcast %cst_19 : f32 to vector<10x144xf32>
    %20 = arith.maximumf %18, %19 : vector<10x144xf32>
    %c0_20 = arith.constant 0 : index
    %c0_21 = arith.constant 0 : index
    %c0_22 = arith.constant 0 : index
    %21 = vector.load %arg4[%c0_20, %c0_21, %c0_22] : memref<1x10x144xf32, #tpu.memory_space<vmem>>, vector<1x10x144xf32>
    %22 = vector.shape_cast %21 : vector<1x10x144xf32> to vector<10x144xf32>
    %23 = vector.shape_cast %20 : vector<10x144xf32> to vector<1x10x144xf32>
    tpu.vector_store %arg4[%c0_20, %c0_21, %c0_22], %23 {strides = array<i32>} : memref<1x10x144xf32, #tpu.memory_space<vmem>>, vector<1x10x144xf32>,
    return
  }
  func.func @transform_0(%arg0: i32) -> (i32, i32, i32, i32) {
    %c0_i32 = arith.constant 0 : i32
    %c0_i32_0 = arith.constant 0 : i32
    %c0_i32_1 = arith.constant 0 : i32
    %c0_i32_2 = arith.constant 0 : i32
    return %arg0, %c0_i32, %c0_i32_0, %c0_i32_1 : i32, i32, i32, i32
  }
  func.func @transform_1(%arg0: i32) -> (i32, i32) {
    %c0_i32 = arith.constant 0 : i32
    %c0_i32_0 = arith.constant 0 : i32
    %c0_i32_1 = arith.constant 0 : i32
    return %c0_i32, %c0_i32_0 : i32, i32
  }
  func.func @transform_2(%arg0: i32) -> (i32, i32) {
    %c0_i32 = arith.constant 0 : i32
    %c0_i32_0 = arith.constant 0 : i32
    %c0_i32_1 = arith.constant 0 : i32
    return %c0_i32, %c0_i32_0 : i32, i32
  }
  func.func @transform_3(%arg0: i32) -> (i32, i32, i32) {
    %c0_i32 = arith.constant 0 : i32
    %c0_i32_0 = arith.constant 0 : i32
    %c0_i32_1 = arith.constant 0 : i32
    return %arg0, %c0_i32, %c0_i32_0 : i32, i32, i32
  }
}

module attributes {stable_mosaic.version = 11 : i64} {
  func.func @_conv2_fc_head_kernel(%arg0: i32, %arg1: memref<1x250x64xf32, #tpu.memory_space<vmem>>, %arg2: memref<20x250xf32, #tpu.memory_space<vmem>>, %arg3: memref<20x1xf32, #tpu.memory_space<vmem>>, %arg4: memref<320x50xf32, #tpu.memory_space<vmem>>, %arg5: memref<1x50xf32, #tpu.memory_space<vmem>>, %arg6: memref<50x10xf32, #tpu.memory_space<vmem>>, %arg7: memref<1x10xf32, #tpu.memory_space<vmem>>, %arg8: memref<1x1x10xf32, #tpu.memory_space<vmem>>, %arg9: memref<1x320xf32, #tpu.memory_space<vmem>>) attributes {dimension_semantics = [#tpu.dimension_semantics<parallel>], iteration_bounds = array<i64: 2>, scalar_prefetch = 0 : i64, scratch_operands = 1 : i64, tpu.core_type = #tpu.core_type<tc>, window_params = [{transform_indices = @transform_0, window_bounds = array<i64: 1, 250, 64>}, {pipeline_mode = #tpu.pipeline_mode<synchronous>, transform_indices = @transform_1, window_bounds = array<i64: 20, 250>}, {pipeline_mode = #tpu.pipeline_mode<synchronous>, transform_indices = @transform_2, window_bounds = array<i64: 20, 1>}, {pipeline_mode = #tpu.pipeline_mode<synchronous>, transform_indices = @transform_3, window_bounds = array<i64: 320, 50>}, {pipeline_mode = #tpu.pipeline_mode<synchronous>, transform_indices = @transform_4, window_bounds = array<i64: 1, 50>}, {pipeline_mode = #tpu.pipeline_mode<synchronous>, transform_indices = @transform_5, window_bounds = array<i64: 50, 10>}, {pipeline_mode = #tpu.pipeline_mode<synchronous>, transform_indices = @transform_6, window_bounds = array<i64: 1, 10>}, {transform_indices = @transform_7, window_bounds = array<i64: 1, 1, 10>}]} {
    %c0 = arith.constant 0 : index
    %c0_0 = arith.constant 0 : index
    %0 = vector.load %arg2[%c0, %c0_0] : memref<20x250xf32, #tpu.memory_space<vmem>>, vector<20x250xf32>
    %c0_1 = arith.constant 0 : index
    %c0_2 = arith.constant 0 : index
    %c0_3 = arith.constant 0 : index
    %1 = vector.load %arg1[%c0_1, %c0_2, %c0_3] : memref<1x250x64xf32, #tpu.memory_space<vmem>>, vector<1x250x64xf32>
    %2 = vector.shape_cast %1 : vector<1x250x64xf32> to vector<250x64xf32>
    %cst = arith.constant dense<0.000000e+00> : vector<20x64xf32>
    %3 = tpu.matmul %0, %2, %cst {dimension_numbers = #tpu.dot_dimension_numbers<[1], [0], [0], [1], [0, 0, 1, 1], [], []>} : vector<20x250xf32>, vector<250x64xf32>, vector<20x64xf32> -> vector<20x64xf32>
    %4 = vector.extract_strided_slice %3 {offsets = [0, 0], sizes = [20, 16], strides = [1, 1]} : vector<20x64xf32> to vector<20x16xf32>
    %5 = vector.extract_strided_slice %3 {offsets = [0, 16], sizes = [20, 16], strides = [1, 1]} : vector<20x64xf32> to vector<20x16xf32>
    %6 = arith.maximumf %4, %5 : vector<20x16xf32>
    %7 = vector.extract_strided_slice %3 {offsets = [0, 32], sizes = [20, 16], strides = [1, 1]} : vector<20x64xf32> to vector<20x16xf32>
    %8 = vector.extract_strided_slice %3 {offsets = [0, 48], sizes = [20, 16], strides = [1, 1]} : vector<20x64xf32> to vector<20x16xf32>
    %9 = arith.maximumf %7, %8 : vector<20x16xf32>
    %10 = arith.maximumf %6, %9 : vector<20x16xf32>
    %c0_4 = arith.constant 0 : index
    %c0_5 = arith.constant 0 : index
    %11 = vector.load %arg3[%c0_4, %c0_5] : memref<20x1xf32, #tpu.memory_space<vmem>>, vector<20x1xf32>
    %12 = vector.broadcast %11 : vector<20x1xf32> to vector<20x16xf32>
    %13 = arith.addf %10, %12 : vector<20x16xf32>
    %cst_6 = arith.constant 0.000000e+00 : f32
    %14 = vector.broadcast %cst_6 : f32 to vector<20x16xf32>
    %15 = arith.maximumf %13, %14 : vector<20x16xf32>
    %16 = vector.extract_strided_slice %15 {offsets = [0, 0], sizes = [1, 16], strides = [1, 1]} : vector<20x16xf32> to vector<1x16xf32>
    %c0_7 = arith.constant 0 : index
    %c0_8 = arith.constant 0 : index
    %17 = vector.load %arg9[%c0_7, %c0_8] : memref<1x320xf32, #tpu.memory_space<vmem>>, vector<1x16xf32>
    tpu.vector_store %arg9[%c0_7, %c0_8], %16 {strides = array<i32>} : memref<1x320xf32, #tpu.memory_space<vmem>>, vector<1x16xf32>,
    %18 = vector.extract_strided_slice %15 {offsets = [1, 0], sizes = [1, 16], strides = [1, 1]} : vector<20x16xf32> to vector<1x16xf32>
    %c0_9 = arith.constant 0 : index
    %c16 = arith.constant 16 : index
    %19 = vector.load %arg9[%c0_9, %c16] : memref<1x320xf32, #tpu.memory_space<vmem>>, vector<1x16xf32>
    tpu.vector_store %arg9[%c0_9, %c16], %18 {strides = array<i32>} : memref<1x320xf32, #tpu.memory_space<vmem>>, vector<1x16xf32>,
    %20 = vector.extract_strided_slice %15 {offsets = [2, 0], sizes = [1, 16], strides = [1, 1]} : vector<20x16xf32> to vector<1x16xf32>
    %c0_10 = arith.constant 0 : index
    %c32 = arith.constant 32 : index
    %21 = vector.load %arg9[%c0_10, %c32] : memref<1x320xf32, #tpu.memory_space<vmem>>, vector<1x16xf32>
    tpu.vector_store %arg9[%c0_10, %c32], %20 {strides = array<i32>} : memref<1x320xf32, #tpu.memory_space<vmem>>, vector<1x16xf32>,
    %22 = vector.extract_strided_slice %15 {offsets = [3, 0], sizes = [1, 16], strides = [1, 1]} : vector<20x16xf32> to vector<1x16xf32>
    %c0_11 = arith.constant 0 : index
    %c48 = arith.constant 48 : index
    %23 = vector.load %arg9[%c0_11, %c48] : memref<1x320xf32, #tpu.memory_space<vmem>>, vector<1x16xf32>
    tpu.vector_store %arg9[%c0_11, %c48], %22 {strides = array<i32>} : memref<1x320xf32, #tpu.memory_space<vmem>>, vector<1x16xf32>,
    %24 = vector.extract_strided_slice %15 {offsets = [4, 0], sizes = [1, 16], strides = [1, 1]} : vector<20x16xf32> to vector<1x16xf32>
    %c0_12 = arith.constant 0 : index
    %c64 = arith.constant 64 : index
    %25 = vector.load %arg9[%c0_12, %c64] : memref<1x320xf32, #tpu.memory_space<vmem>>, vector<1x16xf32>
    tpu.vector_store %arg9[%c0_12, %c64], %24 {strides = array<i32>} : memref<1x320xf32, #tpu.memory_space<vmem>>, vector<1x16xf32>,
    %26 = vector.extract_strided_slice %15 {offsets = [5, 0], sizes = [1, 16], strides = [1, 1]} : vector<20x16xf32> to vector<1x16xf32>
    %c0_13 = arith.constant 0 : index
    %c80 = arith.constant 80 : index
    %27 = vector.load %arg9[%c0_13, %c80] : memref<1x320xf32, #tpu.memory_space<vmem>>, vector<1x16xf32>
    tpu.vector_store %arg9[%c0_13, %c80], %26 {strides = array<i32>} : memref<1x320xf32, #tpu.memory_space<vmem>>, vector<1x16xf32>,
    %28 = vector.extract_strided_slice %15 {offsets = [6, 0], sizes = [1, 16], strides = [1, 1]} : vector<20x16xf32> to vector<1x16xf32>
    %c0_14 = arith.constant 0 : index
    %c96 = arith.constant 96 : index
    %29 = vector.load %arg9[%c0_14, %c96] : memref<1x320xf32, #tpu.memory_space<vmem>>, vector<1x16xf32>
    tpu.vector_store %arg9[%c0_14, %c96], %28 {strides = array<i32>} : memref<1x320xf32, #tpu.memory_space<vmem>>, vector<1x16xf32>,
    %30 = vector.extract_strided_slice %15 {offsets = [7, 0], sizes = [1, 16], strides = [1, 1]} : vector<20x16xf32> to vector<1x16xf32>
    %c0_15 = arith.constant 0 : index
    %c112 = arith.constant 112 : index
    %31 = vector.load %arg9[%c0_15, %c112] : memref<1x320xf32, #tpu.memory_space<vmem>>, vector<1x16xf32>
    tpu.vector_store %arg9[%c0_15, %c112], %30 {strides = array<i32>} : memref<1x320xf32, #tpu.memory_space<vmem>>, vector<1x16xf32>,
    %32 = vector.extract_strided_slice %15 {offsets = [8, 0], sizes = [1, 16], strides = [1, 1]} : vector<20x16xf32> to vector<1x16xf32>
    %c0_16 = arith.constant 0 : index
    %c128 = arith.constant 128 : index
    %33 = vector.load %arg9[%c0_16, %c128] : memref<1x320xf32, #tpu.memory_space<vmem>>, vector<1x16xf32>
    tpu.vector_store %arg9[%c0_16, %c128], %32 {strides = array<i32>} : memref<1x320xf32, #tpu.memory_space<vmem>>, vector<1x16xf32>,
    %34 = vector.extract_strided_slice %15 {offsets = [9, 0], sizes = [1, 16], strides = [1, 1]} : vector<20x16xf32> to vector<1x16xf32>
    %c0_17 = arith.constant 0 : index
    %c144 = arith.constant 144 : index
    %35 = vector.load %arg9[%c0_17, %c144] : memref<1x320xf32, #tpu.memory_space<vmem>>, vector<1x16xf32>
    tpu.vector_store %arg9[%c0_17, %c144], %34 {strides = array<i32>} : memref<1x320xf32, #tpu.memory_space<vmem>>, vector<1x16xf32>,
    %36 = vector.extract_strided_slice %15 {offsets = [10, 0], sizes = [1, 16], strides = [1, 1]} : vector<20x16xf32> to vector<1x16xf32>
    %c0_18 = arith.constant 0 : index
    %c160 = arith.constant 160 : index
    %37 = vector.load %arg9[%c0_18, %c160] : memref<1x320xf32, #tpu.memory_space<vmem>>, vector<1x16xf32>
    tpu.vector_store %arg9[%c0_18, %c160], %36 {strides = array<i32>} : memref<1x320xf32, #tpu.memory_space<vmem>>, vector<1x16xf32>,
    %38 = vector.extract_strided_slice %15 {offsets = [11, 0], sizes = [1, 16], strides = [1, 1]} : vector<20x16xf32> to vector<1x16xf32>
    %c0_19 = arith.constant 0 : index
    %c176 = arith.constant 176 : index
    %39 = vector.load %arg9[%c0_19, %c176] : memref<1x320xf32, #tpu.memory_space<vmem>>, vector<1x16xf32>
    tpu.vector_store %arg9[%c0_19, %c176], %38 {strides = array<i32>} : memref<1x320xf32, #tpu.memory_space<vmem>>, vector<1x16xf32>,
    %40 = vector.extract_strided_slice %15 {offsets = [12, 0], sizes = [1, 16], strides = [1, 1]} : vector<20x16xf32> to vector<1x16xf32>
    %c0_20 = arith.constant 0 : index
    %c192 = arith.constant 192 : index
    %41 = vector.load %arg9[%c0_20, %c192] : memref<1x320xf32, #tpu.memory_space<vmem>>, vector<1x16xf32>
    tpu.vector_store %arg9[%c0_20, %c192], %40 {strides = array<i32>} : memref<1x320xf32, #tpu.memory_space<vmem>>, vector<1x16xf32>,
    %42 = vector.extract_strided_slice %15 {offsets = [13, 0], sizes = [1, 16], strides = [1, 1]} : vector<20x16xf32> to vector<1x16xf32>
    %c0_21 = arith.constant 0 : index
    %c208 = arith.constant 208 : index
    %43 = vector.load %arg9[%c0_21, %c208] : memref<1x320xf32, #tpu.memory_space<vmem>>, vector<1x16xf32>
    tpu.vector_store %arg9[%c0_21, %c208], %42 {strides = array<i32>} : memref<1x320xf32, #tpu.memory_space<vmem>>, vector<1x16xf32>,
    %44 = vector.extract_strided_slice %15 {offsets = [14, 0], sizes = [1, 16], strides = [1, 1]} : vector<20x16xf32> to vector<1x16xf32>
    %c0_22 = arith.constant 0 : index
    %c224 = arith.constant 224 : index
    %45 = vector.load %arg9[%c0_22, %c224] : memref<1x320xf32, #tpu.memory_space<vmem>>, vector<1x16xf32>
    tpu.vector_store %arg9[%c0_22, %c224], %44 {strides = array<i32>} : memref<1x320xf32, #tpu.memory_space<vmem>>, vector<1x16xf32>,
    %46 = vector.extract_strided_slice %15 {offsets = [15, 0], sizes = [1, 16], strides = [1, 1]} : vector<20x16xf32> to vector<1x16xf32>
    %c0_23 = arith.constant 0 : index
    %c240 = arith.constant 240 : index
    %47 = vector.load %arg9[%c0_23, %c240] : memref<1x320xf32, #tpu.memory_space<vmem>>, vector<1x16xf32>
    tpu.vector_store %arg9[%c0_23, %c240], %46 {strides = array<i32>} : memref<1x320xf32, #tpu.memory_space<vmem>>, vector<1x16xf32>,
    %48 = vector.extract_strided_slice %15 {offsets = [16, 0], sizes = [1, 16], strides = [1, 1]} : vector<20x16xf32> to vector<1x16xf32>
    %c0_24 = arith.constant 0 : index
    %c256 = arith.constant 256 : index
    %49 = vector.load %arg9[%c0_24, %c256] : memref<1x320xf32, #tpu.memory_space<vmem>>, vector<1x16xf32>
    tpu.vector_store %arg9[%c0_24, %c256], %48 {strides = array<i32>} : memref<1x320xf32, #tpu.memory_space<vmem>>, vector<1x16xf32>,
    %50 = vector.extract_strided_slice %15 {offsets = [17, 0], sizes = [1, 16], strides = [1, 1]} : vector<20x16xf32> to vector<1x16xf32>
    %c0_25 = arith.constant 0 : index
    %c272 = arith.constant 272 : index
    %51 = vector.load %arg9[%c0_25, %c272] : memref<1x320xf32, #tpu.memory_space<vmem>>, vector<1x16xf32>
    tpu.vector_store %arg9[%c0_25, %c272], %50 {strides = array<i32>} : memref<1x320xf32, #tpu.memory_space<vmem>>, vector<1x16xf32>,
    %52 = vector.extract_strided_slice %15 {offsets = [18, 0], sizes = [1, 16], strides = [1, 1]} : vector<20x16xf32> to vector<1x16xf32>
    %c0_26 = arith.constant 0 : index
    %c288 = arith.constant 288 : index
    %53 = vector.load %arg9[%c0_26, %c288] : memref<1x320xf32, #tpu.memory_space<vmem>>, vector<1x16xf32>
    tpu.vector_store %arg9[%c0_26, %c288], %52 {strides = array<i32>} : memref<1x320xf32, #tpu.memory_space<vmem>>, vector<1x16xf32>,
    %54 = vector.extract_strided_slice %15 {offsets = [19, 0], sizes = [1, 16], strides = [1, 1]} : vector<20x16xf32> to vector<1x16xf32>
    %c0_27 = arith.constant 0 : index
    %c304 = arith.constant 304 : index
    %55 = vector.load %arg9[%c0_27, %c304] : memref<1x320xf32, #tpu.memory_space<vmem>>, vector<1x16xf32>
    tpu.vector_store %arg9[%c0_27, %c304], %54 {strides = array<i32>} : memref<1x320xf32, #tpu.memory_space<vmem>>, vector<1x16xf32>,
    %c0_28 = arith.constant 0 : index
    %c0_29 = arith.constant 0 : index
    %56 = vector.load %arg9[%c0_28, %c0_29] : memref<1x320xf32, #tpu.memory_space<vmem>>, vector<1x320xf32>
    %c0_30 = arith.constant 0 : index
    %c0_31 = arith.constant 0 : index
    %57 = vector.load %arg4[%c0_30, %c0_31] : memref<320x50xf32, #tpu.memory_space<vmem>>, vector<320x50xf32>
    %cst_32 = arith.constant dense<0.000000e+00> : vector<1x50xf32>
    %58 = tpu.matmul %56, %57, %cst_32 {dimension_numbers = #tpu.dot_dimension_numbers<[1], [0], [0], [1], [0, 0, 1, 1], [], []>} : vector<1x320xf32>, vector<320x50xf32>, vector<1x50xf32> -> vector<1x50xf32>
    %c0_33 = arith.constant 0 : index
    %c0_34 = arith.constant 0 : index
    %59 = vector.load %arg5[%c0_33, %c0_34] : memref<1x50xf32, #tpu.memory_space<vmem>>, vector<1x50xf32>
    %60 = arith.addf %58, %59 : vector<1x50xf32>
    %cst_35 = arith.constant 0.000000e+00 : f32
    %61 = vector.broadcast %cst_35 : f32 to vector<1x50xf32>
    %62 = arith.maximumf %60, %61 : vector<1x50xf32>
    %c0_36 = arith.constant 0 : index
    %c0_37 = arith.constant 0 : index
    %63 = vector.load %arg6[%c0_36, %c0_37] : memref<50x10xf32, #tpu.memory_space<vmem>>, vector<50x10xf32>
    %cst_38 = arith.constant dense<0.000000e+00> : vector<1x10xf32>
    %64 = tpu.matmul %62, %63, %cst_38 {dimension_numbers = #tpu.dot_dimension_numbers<[1], [0], [0], [1], [0, 0, 1, 1], [], []>} : vector<1x50xf32>, vector<50x10xf32>, vector<1x10xf32> -> vector<1x10xf32>
    %c0_39 = arith.constant 0 : index
    %c0_40 = arith.constant 0 : index
    %65 = vector.load %arg7[%c0_39, %c0_40] : memref<1x10xf32, #tpu.memory_space<vmem>>, vector<1x10xf32>
    %66 = arith.addf %64, %65 : vector<1x10xf32>
    %cst_41 = arith.constant dense<0xFF800000> : vector<1xf32>
    %67 = vector.multi_reduction <maximumf>, %66, %cst_41 [1] : vector<1x10xf32> to vector<1xf32>
    %68 = vector.shape_cast %67 : vector<1xf32> to vector<1x1xf32>
    %69 = vector.broadcast %68 : vector<1x1xf32> to vector<1x10xf32>
    %70 = arith.subf %66, %69 : vector<1x10xf32>
    %71 = math.exp %70 : vector<1x10xf32>
    %cst_42 = arith.constant dense<0.000000e+00> : vector<1xf32>
    %72 = vector.multi_reduction <add>, %71, %cst_42 [1] : vector<1x10xf32> to vector<1xf32>
    %73 = vector.shape_cast %72 : vector<1xf32> to vector<1x1xf32>
    %74 = math.log %73 : vector<1x1xf32>
    %75 = vector.broadcast %68 : vector<1x1xf32> to vector<1x10xf32>
    %76 = arith.subf %66, %75 : vector<1x10xf32>
    %77 = vector.broadcast %74 : vector<1x1xf32> to vector<1x10xf32>
    %78 = arith.subf %76, %77 : vector<1x10xf32>
    %c0_43 = arith.constant 0 : index
    %c0_44 = arith.constant 0 : index
    %c0_45 = arith.constant 0 : index
    %79 = vector.load %arg8[%c0_43, %c0_44, %c0_45] : memref<1x1x10xf32, #tpu.memory_space<vmem>>, vector<1x1x10xf32>
    %80 = vector.shape_cast %79 : vector<1x1x10xf32> to vector<1x10xf32>
    %81 = vector.shape_cast %78 : vector<1x10xf32> to vector<1x1x10xf32>
    tpu.vector_store %arg8[%c0_43, %c0_44, %c0_45], %81 {strides = array<i32>} : memref<1x1x10xf32, #tpu.memory_space<vmem>>, vector<1x1x10xf32>,
    return
  }
  func.func @transform_0(%arg0: i32) -> (i32, i32, i32) {
    %c0_i32 = arith.constant 0 : i32
    %c0_i32_0 = arith.constant 0 : i32
    %c0_i32_1 = arith.constant 0 : i32
    return %arg0, %c0_i32, %c0_i32_0 : i32, i32, i32
  }
  func.func @transform_1(%arg0: i32) -> (i32, i32) {
    %c0_i32 = arith.constant 0 : i32
    %c0_i32_0 = arith.constant 0 : i32
    %c0_i32_1 = arith.constant 0 : i32
    return %c0_i32, %c0_i32_0 : i32, i32
  }
  func.func @transform_2(%arg0: i32) -> (i32, i32) {
    %c0_i32 = arith.constant 0 : i32
    %c0_i32_0 = arith.constant 0 : i32
    %c0_i32_1 = arith.constant 0 : i32
    return %c0_i32, %c0_i32_0 : i32, i32
  }
  func.func @transform_3(%arg0: i32) -> (i32, i32) {
    %c0_i32 = arith.constant 0 : i32
    %c0_i32_0 = arith.constant 0 : i32
    %c0_i32_1 = arith.constant 0 : i32
    return %c0_i32, %c0_i32_0 : i32, i32
  }
  func.func @transform_4(%arg0: i32) -> (i32, i32) {
    %c0_i32 = arith.constant 0 : i32
    %c0_i32_0 = arith.constant 0 : i32
    %c0_i32_1 = arith.constant 0 : i32
    return %c0_i32, %c0_i32_0 : i32, i32
  }
  func.func @transform_5(%arg0: i32) -> (i32, i32) {
    %c0_i32 = arith.constant 0 : i32
    %c0_i32_0 = arith.constant 0 : i32
    %c0_i32_1 = arith.constant 0 : i32
    return %c0_i32, %c0_i32_0 : i32, i32
  }
  func.func @transform_6(%arg0: i32) -> (i32, i32) {
    %c0_i32 = arith.constant 0 : i32
    %c0_i32_0 = arith.constant 0 : i32
    %c0_i32_1 = arith.constant 0 : i32
    return %c0_i32, %c0_i32_0 : i32, i32
  }
  func.func @transform_7(%arg0: i32) -> (i32, i32, i32) {
    %c0_i32 = arith.constant 0 : i32
    %c0_i32_0 = arith.constant 0 : i32
    %c0_i32_1 = arith.constant 0 : i32
    return %arg0, %c0_i32, %c0_i32_0 : i32, i32, i32
  }
}

</mosaic_0001>

<llo_original>
// kernel: net_forward.2
$region0: #{net_forward.2}
  #allocation0 [shape = 'u32[]', space=smem, size = 0x4, offset = 0x4, fixed_abs, tag = 'smem constant byte address 0x4 - core index']
  #allocation1 [shape = 'u32[144,128]{1,0:T(1,128)}', space=vmem, size = 0x12000, scoped, tag = 'internal scratch']
  %s0 = inlined_call_operand.vmem [shape: f32[2,4,25,144], index: 0, kind: input, shape index: {}]
  %s1 = inlined_call_operand.vmem [shape: f32[10,25], index: 1, kind: input, shape index: {}]
  %s2 = inlined_call_operand.vmem [shape: f32[10,1], index: 2, kind: input, shape index: {}]
  %s3 = inlined_call_operand.vmem [shape: f32[2,10,144], index: 3, kind: output, shape index: {}]
  %s4 = sld [smem:[#allocation0]]
  $region45: #{net_forward.2} parent=0
    _
  %s6 = ssub.s32 1, %s4
  %s7 = scalar_select 0, %s6, %s4
  loop: start=0, step=1, limit=4
  $region2: #{net_forward.2} parent=0 // loop_pre_header
    _
  $region3: #{net_forward.2} parent=0 // loop_header
    %s9 = sphi 0, %s13
    %p10 = scmp.ge.s32.totalorder %s9, 4
    %s19 = sphi 0, %s21
    %s22 = sphi 0, %s19
    %s23 = sphi 0, %s22
    %s39 = sphi 0, %s23
    %s43 = sphi 0, %s43
    %s45 = sphi 0, %s43
    %s46 = sphi 0, %s45
    %s60 = sphi 0, %s46
    %s64 = sphi 0, %s64
    %s66 = sphi 0, %s64
    %s67 = sphi 0, %s66
    %s81 = sphi 0, %s67
    %s87 = sphi 0, %s89
    %s90 = sphi 0, %s87
    %s91 = sphi 0, %s90
    %s107 = sphi 0, %s91
  $region4: #{net_forward.2} parent=0 // loop_header_branch
    %12 = sbr.rel (%p10) target = $region8
  $region5: #{net_forward.2} parent=0 // loop_body
    %s14 = ssub.s32 %s9, 1
    %s15 = ssub.s32 %s9, 2
    %s16 = sadd.s32 %s9, 1
    %s17 = ssub.s32 %s9, %s16
    %p18 = scmp.eq.s32.totalorder %s17, 0
    %s20 = sadd.s32 %s19, 1
    %s21 = scalar_select %p18, %s19, %s20
    %p24 = pneg %p18
    %p25 = scmp.eq.s32.totalorder %s9, 1
    %p26 = por %p24, %p25
    %p27 = scmp.ne.s32.totalorder %s19, %s22
    %p28 = scmp.eq.s32.totalorder %s9, 0
    %p29 = por %p27, %p28
    %p30 = scmp.ne.s32.totalorder %s19, %s22
    %p31 = scmp.eq.s32.totalorder %s14, 1
    %p32 = por %p30, %p31
    %p33 = scmp.ne.s32.totalorder %s22, %s23
    %p34 = scmp.eq.s32.totalorder %s14, 0
    %p35 = por %p33, %p34
    %p36 = scmp.ne.s32.totalorder %s22, %s23
    %p37 = scmp.eq.s32.totalorder %s15, 1
    %p38 = por %p36, %p37
    %p40 = scmp.ne.s32.totalorder %s23, %s39
    %p41 = scmp.eq.s32.totalorder %s15, 0
    %p42 = por %p40, %p41
    %s44 = sadd.s32 %s43, 1
    %p47 = scmp.eq.s32.totalorder %s9, 1
    %p48 = scmp.ne.s32.totalorder %s43, %s45
    %p49 = scmp.eq.s32.totalorder %s9, 0
    %p50 = por %p48, %p49
    %p51 = scmp.ne.s32.totalorder %s43, %s45
    %p52 = scmp.eq.s32.totalorder %s14, 1
    %p53 = por %p51, %p52
    %p54 = scmp.ne.s32.totalorder %s45, %s46
    %p55 = scmp.eq.s32.totalorder %s14, 0
    %p56 = por %p54, %p55
    %p57 = scmp.ne.s32.totalorder %s45, %s46
    %p58 = scmp.eq.s32.totalorder %s15, 1
    %p59 = por %p57, %p58
    %p61 = scmp.ne.s32.totalorder %s46, %s60
    %p62 = scmp.eq.s32.totalorder %s15, 0
    %p63 = por %p61, %p62
    %s65 = sadd.s32 %s64, 1
    %p68 = scmp.eq.s32.totalorder %s9, 1
    %p69 = scmp.ne.s32.totalorder %s64, %s66
    %p70 = scmp.eq.s32.totalorder %s9, 0
    %p71 = por %p69, %p70
    %p72 = scmp.ne.s32.totalorder %s64, %s66
    %p73 = scmp.eq.s32.totalorder %s14, 1
    %p74 = por %p72, %p73
    %p75 = scmp.ne.s32.totalorder %s66, %s67
    %p76 = scmp.eq.s32.totalorder %s14, 0
    %p77 = por %p75, %p76
    %p78 = scmp.ne.s32.totalorder %s66, %s67
    %p79 = scmp.eq.s32.totalorder %s15, 1
    %p80 = por %p78, %p79
    %p82 = scmp.ne.s32.totalorder %s67, %s81
    %p83 = scmp.eq.s32.totalorder %s15, 0
    %p84 = por %p82, %p83
    %s85 = ssub.s32 %s9, %s16
    %p86 = scmp.eq.s32.totalorder %s85, 0
    %s88 = sadd.s32 %s87, 1
    %s89 = scalar_select %p86, %s87, %s88
    %p92 = pneg %p86
    %p93 = scmp.eq.s32.totalorder %s9, 1
    %p94 = por %p92, %p93
    %p95 = scmp.ne.s32.totalorder %s87, %s90
    %p96 = scmp.eq.s32.totalorder %s9, 0
    %p97 = por %p95, %p96
    %p98 = scmp.ne.s32.totalorder %s87, %s90
    %p99 = scmp.eq.s32.totalorder %s14, 1
    %p100 = por %p98, %p99
    %p101 = scmp.ne.s32.totalorder %s90, %s91
    %p102 = scmp.eq.s32.totalorder %s14, 0
    %p103 = por %p101, %p102
    %p104 = scmp.ne.s32.totalorder %s90, %s91
    %p105 = scmp.eq.s32.totalorder %s15, 1
    %p106 = por %p104, %p105
    %p108 = scmp.ne.s32.totalorder %s91, %s107
    %p109 = scmp.eq.s32.totalorder %s15, 0
    %p110 = por %p108, %p109
    %p111 = scmp.le.s32.totalorder 1, %s9
    %p112 = scmp.lt.s32.totalorder %s9, 3
    %p113 = pnand %p111, %p112
    %p114 = pneg %p113
    // Predicated region
    $region9: #{net_forward.2} parent=5 // pred_check
      _
    $region10: #{net_forward.2} parent=5 // pred_check_branch
      %116 = sbr.rel (%p113) target = $region12
    $region11: #{net_forward.2} parent=5 // pred_region
      %s117 = ssub.s32 %s9, 1
      // Predicated region
      $region13: #{net_forward.2} parent=11 // pred_check
        %p118 = pneg %p56
      $region14: #{net_forward.2} parent=11 // pred_check_branch
        %120 = sbr.rel (%p118) target = $region16
      $region15: #{net_forward.2} parent=11 // pred_region
        _
      $region16: #{net_forward.2} parent=11 // pred_fallthru
        _
      // Predicated region
      $region17: #{net_forward.2} parent=11 // pred_check
        %p121 = pneg %p77
      $region18: #{net_forward.2} parent=11 // pred_check_branch
        %123 = sbr.rel (%p121) target = $region20
      $region19: #{net_forward.2} parent=11 // pred_region
        _
      $region20: #{net_forward.2} parent=11 // pred_fallthru
        _
    $region12: #{net_forward.2} parent=5 // pred_fallthru
      _
    %p124 = scmp.lt.s32.totalorder %s9, 2
    // Predicated region
    $region21: #{net_forward.2} parent=5 // pred_check
      %p125 = pneg %p124
    $region22: #{net_forward.2} parent=5 // pred_check_branch
      %127 = sbr.rel (%p125) target = $region24
    $region23: #{net_forward.2} parent=5 // pred_region
      // Predicated region
      $region25: #{net_forward.2} parent=23 // pred_check
        %p128 = pneg %p29
      $region26: #{net_forward.2} parent=23 // pred_check_branch
        %130 = sbr.rel (%p128) target = $region28
      $region27: #{net_forward.2} parent=23 // pred_region
        %p131 = scmp.lt.s32.totalorder %s9, 1
        %s132 = scalar_select %p131, %s9, 1
        %s133 = smul.addr %s132, 32
        %s134 = smul.addr %s133, 8
        %s135 = scalar_lea.vmem %s0, %s134
      $region28: #{net_forward.2} parent=23 // pred_fallthru
        _
    $region24: #{net_forward.2} parent=5 // pred_fallthru
      _
    %p136 = scmp.le.s32.totalorder 1, %s9
    %p137 = scmp.lt.s32.totalorder %s9, 3
    %p138 = pnand %p136, %p137
    %p139 = pneg %p138
    // Predicated region
    $region29: #{net_forward.2} parent=5 // pred_check
      _
    $region30: #{net_forward.2} parent=5 // pred_check_branch
      %141 = sbr.rel (%p138) target = $region32
    $region31: #{net_forward.2} parent=5 // pred_region
      %s142 = ssub.s32 %s9, 1
      %p143 = scmp.lt.s32.totalorder %s14, 1
      %s144 = scalar_select %p143, %s14, 1
      %s145 = smul.addr %s144, 32
      %s146 = smul.addr %s145, 8
      %s147 = scalar_lea.vmem %s0, %s146
      %p148 = pneg %p35
      %p149 = pneg %p32
      %p150 = pneg %p56
      %p151 = pneg %p53
      %p152 = pneg %p77
      %p153 = pneg %p74
      %p154 = pneg %p103
      %p155 = pneg %p100
      %p156 = scmp.lt.s32.totalorder %s14, 1
      %s157 = scalar_select %p156, %s14, 1
      %s158 = smul.addr %s157, 4
      %s159 = smul.addr %s158, 8
      %s160 = scalar_lea.vmem %s3, %s159
      %p161 = scmp.lt.s32.totalorder %s14, 1
      %s162 = scalar_select %p161, %s14, 1
      %s163 = smul.addr %s162, 32
      %s164 = smul.addr %s163, 8
      %s165 = scalar_lea.vmem %s0, %s164
      %p166 = scmp.lt.s32.totalorder %s14, 1
      %s167 = scalar_select %p166, %s14, 1
      %s168 = smul.addr %s167, 4
      %s169 = smul.addr %s168, 8
      %s170 = scalar_lea.vmem %s3, %s169
      %v171 = vld [vmem:[%s1] sm:$0xff]
      %v172 = vld [vmem:[%s1 + $0x8] sm:$0x3]
      %v173 = vld [vmem:[%s165] sm:$0xff]
      %v174 = vld [vmem:[%s165 + $0x8] sm:$0xff]
      %v175 = vld [vmem:[%s165 + $0x10] sm:$0xff]
      %v176 = vld [vmem:[%s165 + $0x18] sm:$0xff]
      %v177 = vld [vmem:[%s165 + $0x20] sm:$0xff]
      %v178 = vld [vmem:[%s165 + $0x28] sm:$0xff]
      %v179 = vld [vmem:[%s165 + $0x30] sm:$0x1]
      %v180 = vld [vmem:[%s165 + $0x38] sm:$0x1]
      %vm181 = vcmask 203776
      %v183 = vsel %vm181, %v171, 0
      %v186 = vsel %vm181, %v172, 0
      %vm188 = vcmask 1040384
      %v190 = vsel %vm188, %v179, 0
      %v193 = vsel %vm188, %v180, 0
      %195 = vmatprep.subr.mxu0 %v174
      %196 = vmatpush1.msra.mxu0 %v173
      %197 = vmatprep.subr.mxu0 %v176
      %198 = vmatpush1.msra.mxu0 %v175
      %199 = vmatprep.subr.mxu0 %v178
      %200 = vmatpush1.msra.mxu0 %v177
      %201 = vmatprep.subr.mxu0 %v193
      %202 = vmatpush1.msra.mxu0 %v190
      %203 = vmatprep.subr.mxu0 0.0
      %204 = vmatpush1.msra.mxu0 0.0
      %205 = vmatprep.subr.mxu0 0.0
      %206 = vmatpush1.msra.mxu0 0.0
      %207 = vmatprep.subr.mxu0 0.0
      %208 = vmatpush1.msra.mxu0 0.0
      %209 = vmatprep.subr.mxu0 0.0
      %210 = vmatpush1.msra.mxu0 0.0
      %211 = vmatprep.subr.mxu0 0.0
      %212 = vmatpush1.msra.mxu0 0.0
      %213 = vmatprep.subr.mxu0 0.0
      %214 = vmatpush1.msra.mxu0 0.0
      %215 = vmatprep.subr.mxu0 0.0
      %216 = vmatpush1.msra.mxu0 0.0
      %217 = vmatprep.subr.mxu0 0.0
      %218 = vmatpush1.msra.mxu0 0.0
      %219 = vmatprep.subr.mxu0 0.0
      %220 = vmatpush1.msra.mxu0 0.0
      %221 = vmatprep.subr.mxu0 0.0
      %222 = vmatpush1.msra.mxu0 0.0
      %223 = vmatprep.subr.mxu0 0.0
      %224 = vmatpush1.msra.mxu0 0.0
      %225 = vmatprep.subr.mxu0 0.0
      %226 = vmatpush1.msra.mxu0 0.0
      %227 = vmatprep.subr.mxu0 0.0
      %228 = vmatpush1.msra.mxu0 0.0
      %229 = vmatprep.subr.mxu0 0.0
      %230 = vmatpush1.msra.mxu0 0.0
      %231 = vmatprep.subr.mxu0 0.0
      %232 = vmatpush1.msra.mxu0 0.0
      %233 = vmatprep.subr.mxu0 0.0
      %234 = vmatpush1.msra.mxu0 0.0
      %235 = vmatprep.subr.mxu0 0.0
      %236 = vmatpush1.msra.mxu0 0.0
      %237 = vmatprep.subr.mxu0 0.0
      %238 = vmatpush1.msra.mxu0 0.0
      %239 = vmatprep.subr.mxu0 0.0
      %240 = vmatpush1.msra.mxu0 0.0
      %241 = vmatprep.subr.mxu0 0.0
      %242 = vmatpush1.msra.mxu0 0.0
      %243 = vmatprep.subr.mxu0 0.0
      %244 = vmatpush1.msra.mxu0 0.0
      %245 = vmatprep.subr.mxu0 0.0
      %246 = vmatpush1.msra.mxu0 0.0
      %247 = vmatprep.subr.mxu0 0.0
      %248 = vmatpush1.msra.mxu0 0.0
      %249 = vmatprep.subr.mxu0 0.0
      %250 = vmatpush1.msra.mxu0 0.0
      %251 = vmatprep.subr.mxu0 0.0
      %252 = vmatpush1.msra.mxu0 0.0
      %253 = vmatprep.subr.mxu0 0.0
      %254 = vmatpush1.msra.mxu0 0.0
      %255 = vmatprep.subr.mxu0 0.0
      %256 = vmatpush1.msra.mxu0 0.0
      %257 = vmatprep.subr.mxu0 0.0
      %258 = vmatpush1.msra.mxu0 0.0
      %259 = vmatprep.mubr.f32.mxu0 0.0
      %260 = vmatmul.mubr.f32.gmra.mrb[0].mxu0 %v183
      %v261 = vpop.f32.mrb[0].mxu0
      %v262 = vadd.f32 0.0, %v261
      %v263 = vpop.f32.mrb[0].mxu0
      %v264 = vadd.f32 0.0, %v263
      %265 = vmatprep.mubr.f32.mxu0 0.0
      %266 = vmatmul.mubr.f32.gmra.mrb[0].mxu0 %v186
      %v267 = vpop.f32.mrb[0].mxu0
      %v268 = vadd.f32 0.0, %v267
      %v269 = vpop.f32.mrb[0].mxu0
      %v270 = vadd.f32 0.0, %v269
      %271 = vdwg.mxu0
      %s272 = scalar_lea.vmem %s165, 64
      %v273 = vld [vmem:[%s272] sm:$0xff]
      %v274 = vld [vmem:[%s272 + $0x8] sm:$0xff]
      %v275 = vld [vmem:[%s272 + $0x10] sm:$0xff]
      %v276 = vld [vmem:[%s272 + $0x18] sm:$0xff]
      %v277 = vld [vmem:[%s272 + $0x20] sm:$0xff]
      %v278 = vld [vmem:[%s272 + $0x28] sm:$0xff]
      %v279 = vld [vmem:[%s272 + $0x30] sm:$0x1]
      %v280 = vld [vmem:[%s272 + $0x38] sm:$0x1]
      %v282 = vsel %vm188, %v279, 0
      %v285 = vsel %vm188, %v280, 0
      %287 = vmatprep.subr.mxu0 %v274
      %288 = vmatpush1.msra.mxu0 %v273
      %289 = vmatprep.subr.mxu0 %v276
      %290 = vmatpush1.msra.mxu0 %v275
      %291 = vmatprep.subr.mxu0 %v278
      %292 = vmatpush1.msra.mxu0 %v277
      %293 = vmatprep.subr.mxu0 %v285
      %294 = vmatpush1.msra.mxu0 %v282
      %295 = vmatprep.subr.mxu0 0.0
      %296 = vmatpush1.msra.mxu0 0.0
      %297 = vmatprep.subr.mxu0 0.0
      %298 = vmatpush1.msra.mxu0 0.0
      %299 = vmatprep.subr.mxu0 0.0
      %300 = vmatpush1.msra.mxu0 0.0
      %301 = vmatprep.subr.mxu0 0.0
      %302 = vmatpush1.msra.mxu0 0.0
      %303 = vmatprep.subr.mxu0 0.0
      %304 = vmatpush1.msra.mxu0 0.0
      %305 = vmatprep.subr.mxu0 0.0
      %306 = vmatpush1.msra.mxu0 0.0
      %307 = vmatprep.subr.mxu0 0.0
      %308 = vmatpush1.msra.mxu0 0.0
      %309 = vmatprep.subr.mxu0 0.0
      %310 = vmatpush1.msra.mxu0 0.0
      %311 = vmatprep.subr.mxu0 0.0
      %312 = vmatpush1.msra.mxu0 0.0
      %313 = vmatprep.subr.mxu0 0.0
      %314 = vmatpush1.msra.mxu0 0.0
      %315 = vmatprep.subr.mxu0 0.0
      %316 = vmatpush1.msra.mxu0 0.0
      %317 = vmatprep.subr.mxu0 0.0
      %318 = vmatpush1.msra.mxu0 0.0
      %319 = vmatprep.subr.mxu0 0.0
      %320 = vmatpush1.msra.mxu0 0.0
      %321 = vmatprep.subr.mxu0 0.0
      %322 = vmatpush1.msra.mxu0 0.0
      %323 = vmatprep.subr.mxu0 0.0
      %324 = vmatpush1.msra.mxu0 0.0
      %325 = vmatprep.subr.mxu0 0.0
      %326 = vmatpush1.msra.mxu0 0.0
      %327 = vmatprep.subr.mxu0 0.0
      %328 = vmatpush1.msra.mxu0 0.0
      %329 = vmatprep.subr.mxu0 0.0
      %330 = vmatpush1.msra.mxu0 0.0
      %331 = vmatprep.subr.mxu0 0.0
      %332 = vmatpush1.msra.mxu0 0.0
      %333 = vmatprep.subr.mxu0 0.0
      %334 = vmatpush1.msra.mxu0 0.0
      %335 = vmatprep.subr.mxu0 0.0
      %336 = vmatpush1.msra.mxu0 0.0
      %337 = vmatprep.subr.mxu0 0.0
      %338 = vmatpush1.msra.mxu0 0.0
      %339 = vmatprep.subr.mxu0 0.0
      %340 = vmatpush1.msra.mxu0 0.0
      %341 = vmatprep.subr.mxu0 0.0
      %342 = vmatpush1.msra.mxu0 0.0
      %343 = vmatprep.subr.mxu0 0.0
      %344 = vmatpush1.msra.mxu0 0.0
      %345 = vmatprep.subr.mxu0 0.0
      %346 = vmatpush1.msra.mxu0 0.0
      %347 = vmatprep.subr.mxu0 0.0
      %348 = vmatpush1.msra.mxu0 0.0
      %349 = vmatprep.subr.mxu0 0.0
      %350 = vmatpush1.msra.mxu0 0.0
      %351 = vmatprep.mubr.f32.mxu0 0.0
      %352 = vmatmul.mubr.f32.gmra.mrb[0].mxu0 %v183
      %v353 = vpop.f32.mrb[0].mxu0
      %v354 = vadd.f32 0.0, %v353
      %v355 = vpop.f32.mrb[0].mxu0
      %v356 = vadd.f32 0.0, %v355
      %357 = vmatprep.mubr.f32.mxu0 0.0
      %358 = vmatmul.mubr.f32.gmra.mrb[0].mxu0 %v186
      %v359 = vpop.f32.mrb[0].mxu0
      %v360 = vadd.f32 0.0, %v359
      %v361 = vpop.f32.mrb[0].mxu0
      %v362 = vadd.f32 0.0, %v361
      %363 = vdwg.mxu0
      %v364 = vmax.f32 %v262, %v354
      %v365 = vmax.f32 %v264, %v356
      %v366 = vmax.f32 %v268, %v360
      %v367 = vmax.f32 %v270, %v362
      %s368 = scalar_lea.vmem %s165, 128
      %v369 = vld [vmem:[%s368] sm:$0xff]
      %v370 = vld [vmem:[%s368 + $0x8] sm:$0xff]
      %v371 = vld [vmem:[%s368 + $0x10] sm:$0xff]
      %v372 = vld [vmem:[%s368 + $0x18] sm:$0xff]
      %v373 = vld [vmem:[%s368 + $0x20] sm:$0xff]
      %v374 = vld [vmem:[%s368 + $0x28] sm:$0xff]
      %v375 = vld [vmem:[%s368 + $0x30] sm:$0x1]
      %v376 = vld [vmem:[%s368 + $0x38] sm:$0x1]
      %v378 = vsel %vm188, %v375, 0
      %v381 = vsel %vm188, %v376, 0
      %383 = vmatprep.subr.mxu0 %v370
      %384 = vmatpush1.msra.mxu0 %v369
      %385 = vmatprep.subr.mxu0 %v372
      %386 = vmatpush1.msra.mxu0 %v371
      %387 = vmatprep.subr.mxu0 %v374
      %388 = vmatpush1.msra.mxu0 %v373
      %389 = vmatprep.subr.mxu0 %v381
      %390 = vmatpush1.msra.mxu0 %v378
      %391 = vmatprep.subr.mxu0 0.0
      %392 = vmatpush1.msra.mxu0 0.0
      %393 = vmatprep.subr.mxu0 0.0
      %394 = vmatpush1.msra.mxu0 0.0
      %395 = vmatprep.subr.mxu0 0.0
      %396 = vmatpush1.msra.mxu0 0.0
      %397 = vmatprep.subr.mxu0 0.0
      %398 = vmatpush1.msra.mxu0 0.0
      %399 = vmatprep.subr.mxu0 0.0
      %400 = vmatpush1.msra.mxu0 0.0
      %401 = vmatprep.subr.mxu0 0.0
      %402 = vmatpush1.msra.mxu0 0.0
      %403 = vmatprep.subr.mxu0 0.0
      %404 = vmatpush1.msra.mxu0 0.0
      %405 = vmatprep.subr.mxu0 0.0
      %406 = vmatpush1.msra.mxu0 0.0
      %407 = vmatprep.subr.mxu0 0.0
      %408 = vmatpush1.msra.mxu0 0.0
      %409 = vmatprep.subr.mxu0 0.0
      %410 = vmatpush1.msra.mxu0 0.0
      %411 = vmatprep.subr.mxu0 0.0
      %412 = vmatpush1.msra.mxu0 0.0
      %413 = vmatprep.subr.mxu0 0.0
      %414 = vmatpush1.msra.mxu0 0.0
      %415 = vmatprep.subr.mxu0 0.0
      %416 = vmatpush1.msra.mxu0 0.0
      %417 = vmatprep.subr.mxu0 0.0
      %418 = vmatpush1.msra.mxu0 0.0
      %419 = vmatprep.subr.mxu0 0.0
      %420 = vmatpush1.msra.mxu0 0.0
      %421 = vmatprep.subr.mxu0 0.0
      %422 = vmatpush1.msra.mxu0 0.0
      %423 = vmatprep.subr.mxu0 0.0
      %424 = vmatpush1.msra.mxu0 0.0
      %425 = vmatprep.subr.mxu0 0.0
      %426 = vmatpush1.msra.mxu0 0.0
      %427 = vmatprep.subr.mxu0 0.0
      %428 = vmatpush1.msra.mxu0 0.0
      %429 = vmatprep.subr.mxu0 0.0
      %430 = vmatpush1.msra.mxu0 0.0
      %431 = vmatprep.subr.mxu0 0.0
      %432 = vmatpush1.msra.mxu0 0.0
      %433 = vmatprep.subr.mxu0 0.0
      %434 = vmatpush1.msra.mxu0 0.0
      %435 = vmatprep.subr.mxu0 0.0
      %436 = vmatpush1.msra.mxu0 0.0
      %437 = vmatprep.subr.mxu0 0.0
      %438 = vmatpush1.msra.mxu0 0.0
      %439 = vmatprep.subr.mxu0 0.0
      %440 = vmatpush1.msra.mxu0 0.0
      %441 = vmatprep.subr.mxu0 0.0
      %442 = vmatpush1.msra.mxu0 0.0
      %443 = vmatprep.subr.mxu0 0.0
      %444 = vmatpush1.msra.mxu0 0.0
      %445 = vmatprep.subr.mxu0 0.0
      %446 = vmatpush1.msra.mxu0 0.0
      %447 = vmatprep.mubr.f32.mxu0 0.0
      %448 = vmatmul.mubr.f32.gmra.mrb[0].mxu0 %v183
      %v449 = vpop.f32.mrb[0].mxu0
      %v450 = vadd.f32 0.0, %v449
      %v451 = vpop.f32.mrb[0].mxu0
      %v452 = vadd.f32 0.0, %v451
      %453 = vmatprep.mubr.f32.mxu0 0.0
      %454 = vmatmul.mubr.f32.gmra.mrb[0].mxu0 %v186
      %v455 = vpop.f32.mrb[0].mxu0
      %v456 = vadd.f32 0.0, %v455
      %v457 = vpop.f32.mrb[0].mxu0
      %v458 = vadd.f32 0.0, %v457
      %459 = vdwg.mxu0
      %v460 = vmax.f32 %v364, %v450
      %v461 = vmax.f32 %v365, %v452
      %v462 = vmax.f32 %v366, %v456
      %v463 = vmax.f32 %v367, %v458
      %s464 = scalar_lea.vmem %s165, 192
      %v465 = vld [vmem:[%s464] sm:$0xff]
      %v466 = vld [vmem:[%s464 + $0x8] sm:$0xff]
      %v467 = vld [vmem:[%s464 + $0x10] sm:$0xff]
      %v468 = vld [vmem:[%s464 + $0x18] sm:$0xff]
      %v469 = vld [vmem:[%s464 + $0x20] sm:$0xff]
      %v470 = vld [vmem:[%s464 + $0x28] sm:$0xff]
      %v471 = vld [vmem:[%s464 + $0x30] sm:$0x1]
      %v472 = vld [vmem:[%s464 + $0x38] sm:$0x1]
      %v474 = vsel %vm188, %v471, 0
      %v477 = vsel %vm188, %v472, 0
      %479 = vmatprep.subr.mxu0 %v466
      %480 = vmatpush1.msra.mxu0 %v465
      %481 = vmatprep.subr.mxu0 %v468
      %482 = vmatpush1.msra.mxu0 %v467
      %483 = vmatprep.subr.mxu0 %v470
      %484 = vmatpush1.msra.mxu0 %v469
      %485 = vmatprep.subr.mxu0 %v477
      %486 = vmatpush1.msra.mxu0 %v474
      %487 = vmatprep.subr.mxu0 0.0
      %488 = vmatpush1.msra.mxu0 0.0
      %489 = vmatprep.subr.mxu0 0.0
      %490 = vmatpush1.msra.mxu0 0.0
      %491 = vmatprep.subr.mxu0 0.0
      %492 = vmatpush1.msra.mxu0 0.0
      %493 = vmatprep.subr.mxu0 0.0
      %494 = vmatpush1.msra.mxu0 0.0
      %495 = vmatprep.subr.mxu0 0.0
      %496 = vmatpush1.msra.mxu0 0.0
      %497 = vmatprep.subr.mxu0 0.0
      %498 = vmatpush1.msra.mxu0 0.0
      %499 = vmatprep.subr.mxu0 0.0
      %500 = vmatpush1.msra.mxu0 0.0
      %501 = vmatprep.subr.mxu0 0.0
      %502 = vmatpush1.msra.mxu0 0.0
      %503 = vmatprep.subr.mxu0 0.0
      %504 = vmatpush1.msra.mxu0 0.0
      %505 = vmatprep.subr.mxu0 0.0
      %506 = vmatpush1.msra.mxu0 0.0
      %507 = vmatprep.subr.mxu0 0.0
      %508 = vmatpush1.msra.mxu0 0.0
      %509 = vmatprep.subr.mxu0 0.0
      %510 = vmatpush1.msra.mxu0 0.0
      %511 = vmatprep.subr.mxu0 0.0
      %512 = vmatpush1.msra.mxu0 0.0
      %513 = vmatprep.subr.mxu0 0.0
      %514 = vmatpush1.msra.mxu0 0.0
      %515 = vmatprep.subr.mxu0 0.0
      %516 = vmatpush1.msra.mxu0 0.0
      %517 = vmatprep.subr.mxu0 0.0
      %518 = vmatpush1.msra.mxu0 0.0
      %519 = vmatprep.subr.mxu0 0.0
      %520 = vmatpush1.msra.mxu0 0.0
      %521 = vmatprep.subr.mxu0 0.0
      %522 = vmatpush1.msra.mxu0 0.0
      %523 = vmatprep.subr.mxu0 0.0
      %524 = vmatpush1.msra.mxu0 0.0
      %525 = vmatprep.subr.mxu0 0.0
      %526 = vmatpush1.msra.mxu0 0.0
      %527 = vmatprep.subr.mxu0 0.0
      %528 = vmatpush1.msra.mxu0 0.0
      %529 = vmatprep.subr.mxu0 0.0
      %530 = vmatpush1.msra.mxu0 0.0
      %531 = vmatprep.subr.mxu0 0.0
      %532 = vmatpush1.msra.mxu0 0.0
      %533 = vmatprep.subr.mxu0 0.0
      %534 = vmatpush1.msra.mxu0 0.0
      %535 = vmatprep.subr.mxu0 0.0
      %536 = vmatpush1.msra.mxu0 0.0
      %537 = vmatprep.subr.mxu0 0.0
      %538 = vmatpush1.msra.mxu0 0.0
      %539 = vmatprep.subr.mxu0 0.0
      %540 = vmatpush1.msra.mxu0 0.0
      %541 = vmatprep.subr.mxu0 0.0
      %542 = vmatpush1.msra.mxu0 0.0
      %543 = vmatprep.mubr.f32.mxu0 0.0
      %544 = vmatmul.mubr.f32.gmra.mrb[0].mxu0 %v183
      %v545 = vpop.f32.mrb[0].mxu0
      %v546 = vadd.f32 0.0, %v545
      %v547 = vpop.f32.mrb[0].mxu0
      %v548 = vadd.f32 0.0, %v547
      %549 = vmatprep.mubr.f32.mxu0 0.0
      %550 = vmatmul.mubr.f32.gmra.mrb[0].mxu0 %v186
      %v551 = vpop.f32.mrb[0].mxu0
      %v552 = vadd.f32 0.0, %v551
      %v553 = vpop.f32.mrb[0].mxu0
      %v554 = vadd.f32 0.0, %v553
      %555 = vdwg.mxu0
      %v556 = vmax.f32 %v460, %v546
      %v557 = vmax.f32 %v461, %v548
      %v558 = vmax.f32 %v462, %v552
      %v559 = vmax.f32 %v463, %v554
      %v560 = vld [vmem:[%s2] sm:$0xff]
      %v561 = vld [vmem:[%s2 + $0x8] sm:$0x3]
      %563 = vset.pattern.permute.xlu0 0
      %564 = vperm.xlu0 %563, %v560
      %v565 = vpop.permute.xlu0 %564
      %568 = vset.pattern.permute.xlu0 0
      %569 = vperm.xlu0 %568, %v561
      %v570 = vpop.permute.xlu0 %569
      %v572 = vadd.f32 %v556, %v565
      %v573 = vadd.f32 %v557, %v565
      %v574 = vadd.f32 %v558, %v570
      %v575 = vadd.f32 %v559, %v570
      %v576 = vmax.f32 %v572, 0.0
      %v577 = vmax.f32 %v573, 0.0
      %v578 = vmax.f32 %v574, 0.0
      %v579 = vmax.f32 %v575, 0.0
      %580 = vst [vmem:[%s170] sm:$0xff] %v576
      %vm581 = vcmask 130048
      %582 = vst.msk [vmem:[%s170 + $0x8] sm:$0xff] %vm581, %v577
      %583 = vst [vmem:[%s170 + $0x10] sm:$0x3] %v578
      %vm584 = vcmask 123904
      %585 = vst.msk [vmem:[%s170 + $0x18] sm:$0x3] %vm584, %v579
      %p586 = scmp.lt.s32.totalorder %s14, 1
      %s587 = scalar_select %p586, %s14, 1
      %s588 = smul.addr %s587, 4
      %s589 = smul.addr %s588, 8
      %s590 = scalar_lea.vmem %s3, %s589
      // Predicated region
      $region33: #{net_forward.2} parent=31 // pred_check
        %p591 = pneg %p100
      $region34: #{net_forward.2} parent=31 // pred_check_branch
        %593 = sbr.rel (%p591) target = $region36
      $region35: #{net_forward.2} parent=31 // pred_region
        _
      $region36: #{net_forward.2} parent=31 // pred_fallthru
        _
    $region32: #{net_forward.2} parent=5 // pred_fallthru
      _
    %p594 = scmp.le.s32.totalorder 2, %s9
    // Predicated region
    $region37: #{net_forward.2} parent=5 // pred_check
      %p595 = pneg %p594
    $region38: #{net_forward.2} parent=5 // pred_check_branch
      %597 = sbr.rel (%p595) target = $region40
    $region39: #{net_forward.2} parent=5 // pred_region
      %s598 = ssub.s32 %s9, 2
      // Predicated region
      $region41: #{net_forward.2} parent=39 // pred_check
        %p599 = pneg %p106
      $region42: #{net_forward.2} parent=39 // pred_check_branch
        %601 = sbr.rel (%p599) target = $region44
      $region43: #{net_forward.2} parent=39 // pred_region
        %p602 = scmp.lt.s32.totalorder %s15, 1
        %s603 = scalar_select %p602, %s15, 1
        %s604 = smul.addr %s603, 4
        %s605 = smul.addr %s604, 8
        %s606 = scalar_lea.vmem %s3, %s605
      $region44: #{net_forward.2} parent=39 // pred_fallthru
        _
    $region40: #{net_forward.2} parent=5 // pred_fallthru
      _
  $region6: #{net_forward.2} parent=0 // loop_footer
    %s13 = sadd.s32 1, %s9
  $region7: #{net_forward.2} parent=0 // loop_footer_branch
    %8 = sbr.rel target = $region3
  $region8: #{net_forward.2} parent=0 // loop_exit
    _

// kernel: net_forward.3
$region0: #{net_forward.3}
  #allocation0 [shape = 'u32[]', space=smem, size = 0x4, offset = 0x4, fixed_abs, tag = 'smem constant byte address 0x4 - core index']
  #allocation1 [shape = 'u32[144,128]{1,0:T(1,128)}', space=vmem, size = 0x12000, scoped, tag = 'internal scratch']
  #allocation2 [shape = 'f32[1,320]{1,0:T(1,128)}', space=vmem, size = 0x600, scoped, tag = 'scratch operand']
  %s0 = inlined_call_operand.vmem [shape: f32[2,250,64], index: 0, kind: input, shape index: {}]
  %s1 = inlined_call_operand.vmem [shape: f32[20,250], index: 1, kind: input, shape index: {}]
  %s2 = inlined_call_operand.vmem [shape: f32[20,1], index: 2, kind: input, shape index: {}]
  %s3 = inlined_call_operand.vmem [shape: f32[320,50], index: 3, kind: input, shape index: {}]
  %s4 = inlined_call_operand.vmem [shape: f32[1,50], index: 4, kind: input, shape index: {}]
  %s5 = inlined_call_operand.vmem [shape: f32[50,10], index: 5, kind: input, shape index: {}]
  %s6 = inlined_call_operand.vmem [shape: f32[1,10], index: 6, kind: input, shape index: {}]
  %s7 = inlined_call_operand.hbm [shape: f32[2,1,10], index: 7, kind: output, shape index: {}]
  %s8 = sld [smem:[#allocation0]]
  $region61: #{net_forward.3} parent=0
    _
  %s10 = ssub.s32 1, %s8
  %s11 = scalar_select 0, %s10, %s8
  $region1: #{net_forward.3} parent=0
    #allocation3 [shape = 'u8[1024]{0}', space=vmem, size = 0x400, scoped, tag = 'output window, operand 0']
    #allocation4 [shape = 's32[2]{0}', space=sflag, size = 0x8, scoped, tag = 'scoped memory for net_forward.3']
    %12 = vsyncpa [#allocation4], 0
    %s13 = scalar_lea.sflag [#allocation4], 1
    %14 = vsyncpa %s13, 0
    loop: start=0, step=1, limit=4
    $region2: #{net_forward.3} parent=1 // loop_pre_header
      _
    $region3: #{net_forward.3} parent=1 // loop_header
      %s16 = sphi 0, %s20
      %p17 = scmp.ge.s32.totalorder %s16, 4
      %s26 = sphi 0, %s28
      %s29 = sphi 0, %s26
      %s30 = sphi 0, %s29
      %s46 = sphi 0, %s30
      %s50 = sphi 0, %s50
      %s52 = sphi 0, %s50
      %s53 = sphi 0, %s52
      %s67 = sphi 0, %s53
      %s71 = sphi 0, %s71
      %s73 = sphi 0, %s71
      %s74 = sphi 0, %s73
      %s88 = sphi 0, %s74
      %s92 = sphi 0, %s92
      %s94 = sphi 0, %s92
      %s95 = sphi 0, %s94
      %s109 = sphi 0, %s95
      %s113 = sphi 0, %s113
      %s115 = sphi 0, %s113
      %s116 = sphi 0, %s115
      %s130 = sphi 0, %s116
      %s134 = sphi 0, %s134
      %s136 = sphi 0, %s134
      %s137 = sphi 0, %s136
      %s151 = sphi 0, %s137
      %s155 = sphi 0, %s155
      %s157 = sphi 0, %s155
      %s158 = sphi 0, %s157
      %s172 = sphi 0, %s158
      %s178 = sphi 0, %s180
      %s181 = sphi 0, %s178
      %s182 = sphi 0, %s181
      %s198 = sphi 0, %s182
    $region4: #{net_forward.3} parent=1 // loop_header_branch
      %19 = sbr.rel (%p17) target = $region8
    $region5: #{net_forward.3} parent=1 // loop_body
      %s21 = ssub.s32 %s16, 1
      %s22 = ssub.s32 %s16, 2
      %s23 = sadd.s32 %s16, 1
      %s24 = ssub.s32 %s16, %s23
      %p25 = scmp.eq.s32.totalorder %s24, 0
      %s27 = sadd.s32 %s26, 1
      %s28 = scalar_select %p25, %s26, %s27
      %p31 = pneg %p25
      %p32 = scmp.eq.s32.totalorder %s16, 1
      %p33 = por %p31, %p32
      %p34 = scmp.ne.s32.totalorder %s26, %s29
      %p35 = scmp.eq.s32.totalorder %s16, 0
      %p36 = por %p34, %p35
      %p37 = scmp.ne.s32.totalorder %s26, %s29
      %p38 = scmp.eq.s32.totalorder %s21, 1
      %p39 = por %p37, %p38
      %p40 = scmp.ne.s32.totalorder %s29, %s30
      %p41 = scmp.eq.s32.totalorder %s21, 0
      %p42 = por %p40, %p41
      %p43 = scmp.ne.s32.totalorder %s29, %s30
      %p44 = scmp.eq.s32.totalorder %s22, 1
      %p45 = por %p43, %p44
      %p47 = scmp.ne.s32.totalorder %s30, %s46
      %p48 = scmp.eq.s32.totalorder %s22, 0
      %p49 = por %p47, %p48
      %s51 = sadd.s32 %s50, 1
      %p54 = scmp.eq.s32.totalorder %s16, 1
      %p55 = scmp.ne.s32.totalorder %s50, %s52
      %p56 = scmp.eq.s32.totalorder %s16, 0
      %p57 = por %p55, %p56
      %p58 = scmp.ne.s32.totalorder %s50, %s52
      %p59 = scmp.eq.s32.totalorder %s21, 1
      %p60 = por %p58, %p59
      %p61 = scmp.ne.s32.totalorder %s52, %s53
      %p62 = scmp.eq.s32.totalorder %s21, 0
      %p63 = por %p61, %p62
      %p64 = scmp.ne.s32.totalorder %s52, %s53
      %p65 = scmp.eq.s32.totalorder %s22, 1
      %p66 = por %p64, %p65
      %p68 = scmp.ne.s32.totalorder %s53, %s67
      %p69 = scmp.eq.s32.totalorder %s22, 0
      %p70 = por %p68, %p69
      %s72 = sadd.s32 %s71, 1
      %p75 = scmp.eq.s32.totalorder %s16, 1
      %p76 = scmp.ne.s32.totalorder %s71, %s73
      %p77 = scmp.eq.s32.totalorder %s16, 0
      %p78 = por %p76, %p77
      %p79 = scmp.ne.s32.totalorder %s71, %s73
      %p80 = scmp.eq.s32.totalorder %s21, 1
      %p81 = por %p79, %p80
      %p82 = scmp.ne.s32.totalorder %s73, %s74
      %p83 = scmp.eq.s32.totalorder %s21, 0
      %p84 = por %p82, %p83
      %p85 = scmp.ne.s32.totalorder %s73, %s74
      %p86 = scmp.eq.s32.totalorder %s22, 1
      %p87 = por %p85, %p86
      %p89 = scmp.ne.s32.totalorder %s74, %s88
      %p90 = scmp.eq.s32.totalorder %s22, 0
      %p91 = por %p89, %p90
      %s93 = sadd.s32 %s92, 1
      %p96 = scmp.eq.s32.totalorder %s16, 1
      %p97 = scmp.ne.s32.totalorder %s92, %s94
      %p98 = scmp.eq.s32.totalorder %s16, 0
      %p99 = por %p97, %p98
      %p100 = scmp.ne.s32.totalorder %s92, %s94
      %p101 = scmp.eq.s32.totalorder %s21, 1
      %p102 = por %p100, %p101
      %p103 = scmp.ne.s32.totalorder %s94, %s95
      %p104 = scmp.eq.s32.totalorder %s21, 0
      %p105 = por %p103, %p104
      %p106 = scmp.ne.s32.totalorder %s94, %s95
      %p107 = scmp.eq.s32.totalorder %s22, 1
      %p108 = por %p106, %p107
      %p110 = scmp.ne.s32.totalorder %s95, %s109
      %p111 = scmp.eq.s32.totalorder %s22, 0
      %p112 = por %p110, %p111
      %s114 = sadd.s32 %s113, 1
      %p117 = scmp.eq.s32.totalorder %s16, 1
      %p118 = scmp.ne.s32.totalorder %s113, %s115
      %p119 = scmp.eq.s32.totalorder %s16, 0
      %p120 = por %p118, %p119
      %p121 = scmp.ne.s32.totalorder %s113, %s115
      %p122 = scmp.eq.s32.totalorder %s21, 1
      %p123 = por %p121, %p122
      %p124 = scmp.ne.s32.totalorder %s115, %s116
      %p125 = scmp.eq.s32.totalorder %s21, 0
      %p126 = por %p124, %p125
      %p127 = scmp.ne.s32.totalorder %s115, %s116
      %p128 = scmp.eq.s32.totalorder %s22, 1
      %p129 = por %p127, %p128
      %p131 = scmp.ne.s32.totalorder %s116, %s130
      %p132 = scmp.eq.s32.totalorder %s22, 0
      %p133 = por %p131, %p132
      %s135 = sadd.s32 %s134, 1
      %p138 = scmp.eq.s32.totalorder %s16, 1
      %p139 = scmp.ne.s32.totalorder %s134, %s136
      %p140 = scmp.eq.s32.totalorder %s16, 0
      %p141 = por %p139, %p140
      %p142 = scmp.ne.s32.totalorder %s134, %s136
      %p143 = scmp.eq.s32.totalorder %s21, 1
      %p144 = por %p142, %p143
      %p145 = scmp.ne.s32.totalorder %s136, %s137
      %p146 = scmp.eq.s32.totalorder %s21, 0
      %p147 = por %p145, %p146
      %p148 = scmp.ne.s32.totalorder %s136, %s137
      %p149 = scmp.eq.s32.totalorder %s22, 1
      %p150 = por %p148, %p149
      %p152 = scmp.ne.s32.totalorder %s137, %s151
      %p153 = scmp.eq.s32.totalorder %s22, 0
      %p154 = por %p152, %p153
      %s156 = sadd.s32 %s155, 1
      %p159 = scmp.eq.s32.totalorder %s16, 1
      %p160 = scmp.ne.s32.totalorder %s155, %s157
      %p161 = scmp.eq.s32.totalorder %s16, 0
      %p162 = por %p160, %p161
      %p163 = scmp.ne.s32.totalorder %s155, %s157
      %p164 = scmp.eq.s32.totalorder %s21, 1
      %p165 = por %p163, %p164
      %p166 = scmp.ne.s32.totalorder %s157, %s158
      %p167 = scmp.eq.s32.totalorder %s21, 0
      %p168 = por %p166, %p167
      %p169 = scmp.ne.s32.totalorder %s157, %s158
      %p170 = scmp.eq.s32.totalorder %s22, 1
      %p171 = por %p169, %p170
      %p173 = scmp.ne.s32.totalorder %s158, %s172
      %p174 = scmp.eq.s32.totalorder %s22, 0
      %p175 = por %p173, %p174
      %s176 = ssub.s32 %s16, %s23
      %p177 = scmp.eq.s32.totalorder %s176, 0
      %s179 = sadd.s32 %s178, 1
      %s180 = scalar_select %p177, %s178, %s179
      %p183 = pneg %p177
      %p184 = scmp.eq.s32.totalorder %s16, 1
      %p185 = por %p183, %p184
      %p186 = scmp.ne.s32.totalorder %s178, %s181
      %p187 = scmp.eq.s32.totalorder %s16, 0
      %p188 = por %p186, %p187
      %p189 = scmp.ne.s32.totalorder %s178, %s181
      %p190 = scmp.eq.s32.totalorder %s21, 1
      %p191 = por %p189, %p190
      %p192 = scmp.ne.s32.totalorder %s181, %s182
      %p193 = scmp.eq.s32.totalorder %s21, 0
      %p194 = por %p192, %p193
      %p195 = scmp.ne.s32.totalorder %s181, %s182
      %p196 = scmp.eq.s32.totalorder %s22, 1
      %p197 = por %p195, %p196
      %p199 = scmp.ne.s32.totalorder %s182, %s198
      %p200 = scmp.eq.s32.totalorder %s22, 0
      %p201 = por %p199, %p200
      %p202 = scmp.le.s32.totalorder 1, %s16
      %p203 = scmp.lt.s32.totalorder %s16, 3
      %p204 = pnand %p202, %p203
      %p205 = pneg %p204
      // Predicated region
      $region9: #{net_forward.3} parent=5 // pred_check
        _
      $region10: #{net_forward.3} parent=5 // pred_check_branch
        %207 = sbr.rel (%p204) target = $region12
      $region11: #{net_forward.3} parent=5 // pred_region
        %s208 = ssub.s32 %s16, 1
        // Predicated region
        $region13: #{net_forward.3} parent=11 // pred_check
          %p209 = pneg %p63
        $region14: #{net_forward.3} parent=11 // pred_check_branch
          %211 = sbr.rel (%p209) target = $region16
        $region15: #{net_forward.3} parent=11 // pred_region
          _
        $region16: #{net_forward.3} parent=11 // pred_fallthru
          _
        // Predicated region
        $region17: #{net_forward.3} parent=11 // pred_check
          %p212 = pneg %p84
        $region18: #{net_forward.3} parent=11 // pred_check_branch
          %214 = sbr.rel (%p212) target = $region20
        $region19: #{net_forward.3} parent=11 // pred_region
          _
        $region20: #{net_forward.3} parent=11 // pred_fallthru
          _
        // Predicated region
        $region21: #{net_forward.3} parent=11 // pred_check
          %p215 = pneg %p105
        $region22: #{net_forward.3} parent=11 // pred_check_branch
          %217 = sbr.rel (%p215) target = $region24
        $region23: #{net_forward.3} parent=11 // pred_region
          _
        $region24: #{net_forward.3} parent=11 // pred_fallthru
          _
        // Predicated region
        $region25: #{net_forward.3} parent=11 // pred_check
          %p218 = pneg %p126
        $region26: #{net_forward.3} parent=11 // pred_check_branch
          %220 = sbr.rel (%p218) target = $region28
        $region27: #{net_forward.3} parent=11 // pred_region
          _
        $region28: #{net_forward.3} parent=11 // pred_fallthru
          _
        // Predicated region
        $region29: #{net_forward.3} parent=11 // pred_check
          %p221 = pneg %p147
        $region30: #{net_forward.3} parent=11 // pred_check_branch
          %223 = sbr.rel (%p221) target = $region32
        $region31: #{net_forward.3} parent=11 // pred_region
          _
        $region32: #{net_forward.3} parent=11 // pred_fallthru
          _
        // Predicated region
        $region33: #{net_forward.3} parent=11 // pred_check
          %p224 = pneg %p168
        $region34: #{net_forward.3} parent=11 // pred_check_branch
          %226 = sbr.rel (%p224) target = $region36
        $region35: #{net_forward.3} parent=11 // pred_region
          _
        $region36: #{net_forward.3} parent=11 // pred_fallthru
          _
      $region12: #{net_forward.3} parent=5 // pred_fallthru
        _
      %p227 = scmp.lt.s32.totalorder %s16, 2
      // Predicated region
      $region37: #{net_forward.3} parent=5 // pred_check
        %p228 = pneg %p227
      $region38: #{net_forward.3} parent=5 // pred_check_branch
        %230 = sbr.rel (%p228) target = $region40
      $region39: #{net_forward.3} parent=5 // pred_region
        // Predicated region
        $region41: #{net_forward.3} parent=39 // pred_check
          %p231 = pneg %p36
        $region42: #{net_forward.3} parent=39 // pred_check_branch
          %233 = sbr.rel (%p231) target = $region44
        $region43: #{net_forward.3} parent=39 // pred_region
          %p234 = scmp.lt.s32.totalorder %s16, 1
          %s235 = scalar_select %p234, %s16, 1
          %s236 = smul.addr %s235, 32
          %s237 = smul.addr %s236, 8
          %s238 = scalar_lea.vmem %s0, %s237
        $region44: #{net_forward.3} parent=39 // pred_fallthru
          _
      $region40: #{net_forward.3} parent=5 // pred_fallthru
        _
      %p239 = scmp.le.s32.totalorder 1, %s16
      %p240 = scmp.lt.s32.totalorder %s16, 3
      %p241 = pnand %p239, %p240
      %p242 = pneg %p241
      // Predicated region
      $region45: #{net_forward.3} parent=5 // pred_check
        _
      $region46: #{net_forward.3} parent=5 // pred_check_branch
        %244 = sbr.rel (%p241) target = $region48
      $region47: #{net_forward.3} parent=5 // pred_region
        %s245 = ssub.s32 %s16, 1
        %p246 = scmp.lt.s32.totalorder %s21, 1
        %s247 = scalar_select %p246, %s21, 1
        %s248 = smul.addr %s247, 32
        %s249 = smul.addr %s248, 8
        %s250 = scalar_lea.vmem %s0, %s249
        %p251 = pneg %p42
        %p252 = pneg %p39
        %p253 = pneg %p63
        %p254 = pneg %p60
        %p255 = pneg %p84
        %p256 = pneg %p81
        %p257 = pneg %p105
        %p258 = pneg %p102
        %p259 = pneg %p126
        %p260 = pneg %p123
        %p261 = pneg %p147
        %p262 = pneg %p144
        %p263 = pneg %p168
        %p264 = pneg %p165
        %p265 = pneg %p194
        %p266 = pneg %p191
        %s267 = sand.u32 %s181, 1
        %s268 = scalar_lea.sflag [#allocation4], %s267
        %s269 = sand.u32 %s181, 1
        %s270 = scalar_lea.vmem [#allocation3], %s269
        %p271 = scmp.lt.s32.totalorder %s21, 1
        %s272 = scalar_select %p271, %s21, 1
        %s273 = smul.addr %s272, 32
        %s274 = smul.addr %s273, 8
        %s275 = scalar_lea.vmem %s0, %s274
        %v276 = vld [vmem:[%s1] sm:$0xff]
        %v277 = vld [vmem:[%s1 + $0x8] sm:$0xff]
        %v278 = vld [vmem:[%s1 + $0x10] sm:$0xff]
        %v279 = vld [vmem:[%s1 + $0x18] sm:$0xff]
        %v280 = vld [vmem:[%s1 + $0x20] sm:$0xf]
        %v281 = vld [vmem:[%s1 + $0x28] sm:$0xf]
        %v282 = vld [vmem:[%s275] sm:$0xff]
        %v283 = vld [vmem:[%s275 + $0x8] sm:$0xff]
        %v284 = vld [vmem:[%s275 + $0x10] sm:$0xff]
        %v285 = vld [vmem:[%s275 + $0x18] sm:$0xff]
        %v286 = vld [vmem:[%s275 + $0x20] sm:$0xff]
        %v287 = vld [vmem:[%s275 + $0x28] sm:$0xff]
        %v288 = vld [vmem:[%s275 + $0x30] sm:$0xff]
        %v289 = vld [vmem:[%s275 + $0x38] sm:$0xff]
        %v290 = vld [vmem:[%s275 + $0x40] sm:$0xff]
        %v291 = vld [vmem:[%s275 + $0x48] sm:$0xff]
        %v292 = vld [vmem:[%s275 + $0x50] sm:$0xff]
        %v293 = vld [vmem:[%s275 + $0x58] sm:$0xff]
        %v294 = vld [vmem:[%s275 + $0x60] sm:$0xff]
        %v295 = vld [vmem:[%s275 + $0x68] sm:$0xff]
        %v296 = vld [vmem:[%s275 + $0x70] sm:$0xff]
        %v297 = vld [vmem:[%s275 + $0x78] sm:$0xff]
        %v298 = vld [vmem:[%s275 + $0x80] sm:$0xff]
        %v299 = vld [vmem:[%s275 + $0x88] sm:$0xff]
        %v300 = vld [vmem:[%s275 + $0x90] sm:$0xff]
        %v301 = vld [vmem:[%s275 + $0x98] sm:$0xff]
        %v302 = vld [vmem:[%s275 + $0xa0] sm:$0xff]
        %v303 = vld [vmem:[%s275 + $0xa8] sm:$0xff]
        %v304 = vld [vmem:[%s275 + $0xb0] sm:$0xff]
        %v305 = vld [vmem:[%s275 + $0xb8] sm:$0xff]
        %v306 = vld [vmem:[%s275 + $0xc0] sm:$0xff]
        %v307 = vld [vmem:[%s275 + $0xc8] sm:$0xff]
        %v308 = vld [vmem:[%s275 + $0xd0] sm:$0xff]
        %v309 = vld [vmem:[%s275 + $0xd8] sm:$0xff]
        %v310 = vld [vmem:[%s275 + $0xe0] sm:$0xff]
        %v311 = vld [vmem:[%s275 + $0xe8] sm:$0xff]
        %v312 = vld [vmem:[%s275 + $0xf0] sm:$0xff]
        %v313 = vld [vmem:[%s275 + $0xf8] sm:$0x3]
        %vm314 = vcmask 998400
        %v316 = vsel %vm314, %v277, 0
        %v319 = vsel %vm314, %v279, 0
        %v322 = vsel %vm314, %v281, 0
        %vm324 = vcmask 1041408
        %v326 = vsel %vm324, %v313, 0
        %328 = vmatprep.subr.mxu0 0.0
        %329 = vmatpush1.msra.mxu0 %v282
        %330 = vmatprep.subr.mxu0 0.0
        %331 = vmatpush1.msra.mxu0 %v283
        %332 = vmatprep.subr.mxu0 0.0
        %333 = vmatpush1.msra.mxu0 %v284
        %334 = vmatprep.subr.mxu0 0.0
        %335 = vmatpush1.msra.mxu0 %v285
        %336 = vmatprep.subr.mxu0 0.0
        %337 = vmatpush1.msra.mxu0 %v286
        %338 = vmatprep.subr.mxu0 0.0
        %339 = vmatpush1.msra.mxu0 %v287
        %340 = vmatprep.subr.mxu0 0.0
        %341 = vmatpush1.msra.mxu0 %v288
        %342 = vmatprep.subr.mxu0 0.0
        %343 = vmatpush1.msra.mxu0 %v289
        %344 = vmatprep.subr.mxu0 0.0
        %345 = vmatpush1.msra.mxu0 %v290
        %346 = vmatprep.subr.mxu0 0.0
        %347 = vmatpush1.msra.mxu0 %v291
        %348 = vmatprep.subr.mxu0 0.0
        %349 = vmatpush1.msra.mxu0 %v292
        %350 = vmatprep.subr.mxu0 0.0
        %351 = vmatpush1.msra.mxu0 %v293
        %352 = vmatprep.subr.mxu0 0.0
        %353 = vmatpush1.msra.mxu0 %v294
        %354 = vmatprep.subr.mxu0 0.0
        %355 = vmatpush1.msra.mxu0 %v295
        %356 = vmatprep.subr.mxu0 0.0
        %357 = vmatpush1.msra.mxu0 %v296
        %358 = vmatprep.subr.mxu0 0.0
        %359 = vmatpush1.msra.mxu0 %v297
        %360 = vmatprep.subr.mxu0 0.0
        %361 = vmatpush1.msra.mxu0 %v298
        %362 = vmatprep.subr.mxu0 0.0
        %363 = vmatpush1.msra.mxu0 %v299
        %364 = vmatprep.subr.mxu0 0.0
        %365 = vmatpush1.msra.mxu0 %v300
        %366 = vmatprep.subr.mxu0 0.0
        %367 = vmatpush1.msra.mxu0 %v301
        %368 = vmatprep.subr.mxu0 0.0
        %369 = vmatpush1.msra.mxu0 %v302
        %370 = vmatprep.subr.mxu0 0.0
        %371 = vmatpush1.msra.mxu0 %v303
        %372 = vmatprep.subr.mxu0 0.0
        %373 = vmatpush1.msra.mxu0 %v304
        %374 = vmatprep.subr.mxu0 0.0
        %375 = vmatpush1.msra.mxu0 %v305
        %376 = vmatprep.subr.mxu0 0.0
        %377 = vmatpush1.msra.mxu0 %v306
        %378 = vmatprep.subr.mxu0 0.0
        %379 = vmatpush1.msra.mxu0 %v307
        %380 = vmatprep.subr.mxu0 0.0
        %381 = vmatpush1.msra.mxu0 %v308
        %382 = vmatprep.subr.mxu0 0.0
        %383 = vmatpush1.msra.mxu0 %v309
        %384 = vmatprep.subr.mxu0 0.0
        %385 = vmatpush1.msra.mxu0 %v310
        %386 = vmatprep.subr.mxu0 0.0
        %387 = vmatpush1.msra.mxu0 %v311
        %388 = vmatprep.subr.mxu0 0.0
        %389 = vmatpush1.msra.mxu0 %v312
        %390 = vmatprep.subr.mxu0 0.0
        %391 = vmatpush1.msra.mxu0 %v326
        %392 = vmatprep.mubr.f32.mxu0 %v316
        %393 = vmatmul.mubr.f32.gmra.mrb[0].mxu0 %v276
        %v394 = vpop.f32.mrb[0].mxu0
        %v395 = vadd.f32 0.0, %v394
        %v396 = vpop.f32.mrb[0].mxu0
        %397 = vmatprep.mubr.f32.mxu0 %v319
        %398 = vmatmul.mubr.f32.gmra.mrb[0].mxu0 %v278
        %v399 = vpop.f32.mrb[0].mxu0
        %v400 = vadd.f32 0.0, %v399
        %v401 = vpop.f32.mrb[0].mxu0
        %402 = vmatprep.mubr.f32.mxu0 %v322
        %403 = vmatmul.mubr.f32.gmra.mrb[0].mxu0 %v280
        %v404 = vpop.f32.mrb[0].mxu0
        %v405 = vadd.f32 0.0, %v404
        %v406 = vpop.f32.mrb[0].mxu0
        %407 = vdwg.mxu0
        %411 = vrot.lane.b32.xlu0 %v395, 112
        %v412 = vpop.permute.xlu0 %411
        %413 = vrot.lane.b32.xlu0 %v400, 112
        %v414 = vpop.permute.xlu0 %413
        %415 = vrot.lane.b32.xlu0 %v405, 112
        %v416 = vpop.permute.xlu0 %415
        %v420 = vmax.f32 %v395, %v412
        %v421 = vmax.f32 %v400, %v414
        %v422 = vmax.f32 %v405, %v416
        %426 = vrot.lane.b32.xlu0 %v420, 96
        %v427 = vpop.permute.xlu0 %426
        %428 = vrot.lane.b32.xlu0 %v421, 96
        %v429 = vpop.permute.xlu0 %428
        %430 = vrot.lane.b32.xlu0 %v422, 96
        %v431 = vpop.permute.xlu0 %430
        %v435 = vmax.f32 %v420, %v427
        %v436 = vmax.f32 %v421, %v429
        %v437 = vmax.f32 %v422, %v431
        %v438 = vld [vmem:[%s2] sm:$0xff]
        %v439 = vld [vmem:[%s2 + $0x8] sm:$0xff]
        %v440 = vld [vmem:[%s2 + $0x10] sm:$0xf]
        %442 = vset.pattern.permute.xlu0 0
        %443 = vperm.xlu0 %442, %v438
        %v444 = vpop.permute.xlu0 %443
        %447 = vset.pattern.permute.xlu0 0
        %448 = vperm.xlu0 %447, %v439
        %v449 = vpop.permute.xlu0 %448
        %452 = vset.pattern.permute.xlu0 0
        %453 = vperm.xlu0 %452, %v440
        %v454 = vpop.permute.xlu0 %453
        %v456 = vadd.f32 %v435, %v444
        %v457 = vadd.f32 %v436, %v449
        %v458 = vadd.f32 %v437, %v454
        %v459 = vmax.f32 %v456, 0.0
        %v460 = vmax.f32 %v457, 0.0
        %v461 = vmax.f32 %v458, 0.0
        %v462 = vlaneseq
        %vm463 = vcmp.ge.s32.totalorder %v462, 0
        %vm464 = vcmp.lt.s32.totalorder %v462, 16
        %vm465 = vmand %vm463, %vm464
        %466 = vst.msk [vmem:[#allocation2] sm:$0x1] %vm465, %v459
        %v469 = vunpack.c.l.s4 1966171168
        %v470 = vunpack.c.0.s8 %v469
        %v471 = vlaneseq
        %v472 = vshrl.u32 %v471, 7
        %v473 = vsub.s32 %v470, %v472
        %v474 = vrot.slane %v459, %v473
        %v475 = vcombine.high %v474, %v474
        %v477 = vunpack.c.l.s4 1966171168
        %v478 = vunpack.c.0.s8 %v477
        %v479 = vlaneseq
        %v480 = vshrl.u32 %v479, 7
        %v481 = vsub.s32 %v478, %v480
        %v482 = vrot.slane %v474, %v481
        %v484 = vunpack.c.l.s4 1966171168
        %v485 = vunpack.c.0.s8 %v484
        %v486 = vlaneseq
        %v487 = vshrl.u32 %v486, 7
        %v488 = vsub.s32 %v485, %v487
        %v489 = vrot.slane %v475, %v488
        %490 = vrot.lane.b32.xlu0 %v489, 16
        %v491 = vpop.permute.xlu0 %490
        %vm493 = vcmp.ge.s32.totalorder %v462, 16
        %vm494 = vcmp.lt.s32.totalorder %v462, 32
        %vm495 = vmand %vm493, %vm494
        %496 = vst.msk [vmem:[#allocation2] sm:$0x1] %vm495, %v491
        %v497 = vcombine.high %v482, %v482
        %498 = vrot.lane.b32.xlu0 %v497, 32
        %v499 = vpop.permute.xlu0 %498
        %vm501 = vcmp.ge.s32.totalorder %v462, 32
        %vm502 = vcmp.lt.s32.totalorder %v462, 48
        %vm503 = vmand %vm501, %vm502
        %504 = vst.msk [vmem:[#allocation2] sm:$0x1] %vm503, %v499
        %v505 = vcombine.high %v489, %v489
        %506 = vrot.lane.b32.xlu0 %v505, 48
        %v507 = vpop.permute.xlu0 %506
        %vm509 = vcmp.ge.s32.totalorder %v462, 48
        %vm510 = vcmp.lt.s32.totalorder %v462, 64
        %vm511 = vmand %vm509, %vm510
        %512 = vst.msk [vmem:[#allocation2] sm:$0x1] %vm511, %v507
        %v513 = vcombine.high %v459, %v459
        %v515 = vunpack.c.l.s4 1966171168
        %v516 = vunpack.c.0.s8 %v515
        %v517 = vlaneseq
        %v518 = vshrl.u32 %v517, 7
        %v519 = vsub.s32 %v516, %v518
        %v520 = vrot.slane %v513, %v519
        %v522 = vunpack.c.l.s4 1966171168
        %v523 = vunpack.c.0.s8 %v522
        %v524 = vlaneseq
        %v525 = vshrl.u32 %v524, 7
        %v526 = vsub.s32 %v523, %v525
        %v527 = vrot.slane %v520, %v526
        %528 = vrot.lane.b32.xlu0 %v527, 64
        %v529 = vpop.permute.xlu0 %528
        %vm531 = vcmp.ge.s32.totalorder %v462, 64
        %vm532 = vcmp.lt.s32.totalorder %v462, 80
        %vm533 = vmand %vm531, %vm532
        %534 = vst.msk [vmem:[#allocation2] sm:$0x1] %vm533, %v529
        %v535 = vcombine.high %v520, %v520
        %v537 = vunpack.c.l.s4 1966171168
        %v538 = vunpack.c.0.s8 %v537
        %v539 = vlaneseq
        %v540 = vshrl.u32 %v539, 7
        %v541 = vsub.s32 %v538, %v540
        %v542 = vrot.slane %v535, %v541
        %543 = vrot.lane.b32.xlu0 %v542, 80
        %v544 = vpop.permute.xlu0 %543
        %vm546 = vcmp.ge.s32.totalorder %v462, 80
        %vm547 = vcmp.lt.s32.totalorder %v462, 96
        %vm548 = vmand %vm546, %vm547
        %549 = vst.msk [vmem:[#allocation2] sm:$0x1] %vm548, %v544
        %v550 = vcombine.high %v527, %v527
        %551 = vrot.lane.b32.xlu0 %v550, 96
        %v552 = vpop.permute.xlu0 %551
        %vm554 = vcmp.ge.s32.totalorder %v462, 96
        %vm555 = vcmp.lt.s32.totalorder %v462, 112
        %vm556 = vmand %vm554, %vm555
        %557 = vst.msk [vmem:[#allocation2] sm:$0x1] %vm556, %v552
        %v558 = vcombine.high %v542, %v542
        %559 = vrot.lane.b32.xlu0 %v558, 112
        %v560 = vpop.permute.xlu0 %559
        %vm562 = vcmp.ge.s32.totalorder %v462, 112
        %vm563 = vcmp.lt.s32.totalorder %v462, 128
        %vm564 = vmand %vm562, %vm563
        %565 = vst.msk [vmem:[#allocation2] sm:$0x1] %vm564, %v560
        %566 = vst.msk [vmem:[#allocation2 + $0x1] sm:$0x1] %vm465, %v460
        %v569 = vunpack.c.l.s4 1966171168
        %v570 = vunpack.c.0.s8 %v569
        %v571 = vlaneseq
        %v572 = vshrl.u32 %v571, 7
        %v573 = vsub.s32 %v570, %v572
        %v574 = vrot.slane %v460, %v573
        %v575 = vcombine.high %v574, %v574
        %v577 = vunpack.c.l.s4 1966171168
        %v578 = vunpack.c.0.s8 %v577
        %v579 = vlaneseq
        %v580 = vshrl.u32 %v579, 7
        %v581 = vsub.s32 %v578, %v580
        %v582 = vrot.slane %v574, %v581
        %v584 = vunpack.c.l.s4 1966171168
        %v585 = vunpack.c.0.s8 %v584
        %v586 = vlaneseq
        %v587 = vshrl.u32 %v586, 7
        %v588 = vsub.s32 %v585, %v587
        %v589 = vrot.slane %v575, %v588
        %590 = vrot.lane.b32.xlu0 %v589, 16
        %v591 = vpop.permute.xlu0 %590
        %593 = vst.msk [vmem:[#allocation2 + $0x1] sm:$0x1] %vm495, %v591
        %v594 = vcombine.high %v582, %v582
        %595 = vrot.lane.b32.xlu0 %v594, 32
        %v596 = vpop.permute.xlu0 %595
        %598 = vst.msk [vmem:[#allocation2 + $0x1] sm:$0x1] %vm503, %v596
        %v599 = vcombine.high %v589, %v589
        %600 = vrot.lane.b32.xlu0 %v599, 48
        %v601 = vpop.permute.xlu0 %600
        %603 = vst.msk [vmem:[#allocation2 + $0x1] sm:$0x1] %vm511, %v601
        %v604 = vcombine.high %v460, %v460
        %v606 = vunpack.c.l.s4 1966171168
        %v607 = vunpack.c.0.s8 %v606
        %v608 = vlaneseq
        %v609 = vshrl.u32 %v608, 7
        %v610 = vsub.s32 %v607, %v609
        %v611 = vrot.slane %v604, %v610
        %v613 = vunpack.c.l.s4 1966171168
        %v614 = vunpack.c.0.s8 %v613
        %v615 = vlaneseq
        %v616 = vshrl.u32 %v615, 7
        %v617 = vsub.s32 %v614, %v616
        %v618 = vrot.slane %v611, %v617
        %619 = vrot.lane.b32.xlu0 %v618, 64
        %v620 = vpop.permute.xlu0 %619
        %622 = vst.msk [vmem:[#allocation2 + $0x1] sm:$0x1] %vm533, %v620
        %v623 = vcombine.high %v611, %v611
        %v625 = vunpack.c.l.s4 1966171168
        %v626 = vunpack.c.0.s8 %v625
        %v627 = vlaneseq
        %v628 = vshrl.u32 %v627, 7
        %v629 = vsub.s32 %v626, %v628
        %v630 = vrot.slane %v623, %v629
        %631 = vrot.lane.b32.xlu0 %v630, 80
        %v632 = vpop.permute.xlu0 %631
        %634 = vst.msk [vmem:[#allocation2 + $0x1] sm:$0x1] %vm548, %v632
        %v635 = vcombine.high %v618, %v618
        %636 = vrot.lane.b32.xlu0 %v635, 96
        %v637 = vpop.permute.xlu0 %636
        %639 = vst.msk [vmem:[#allocation2 + $0x1] sm:$0x1] %vm556, %v637
        %v640 = vcombine.high %v630, %v630
        %641 = vrot.lane.b32.xlu0 %v640, 112
        %v642 = vpop.permute.xlu0 %641
        %644 = vst.msk [vmem:[#allocation2 + $0x1] sm:$0x1] %vm564, %v642
        %645 = vst.msk [vmem:[#allocation2 + $0x2] sm:$0x1] %vm465, %v461
        %v648 = vunpack.c.l.s4 1966171168
        %v649 = vunpack.c.0.s8 %v648
        %v650 = vlaneseq
        %v651 = vshrl.u32 %v650, 7
        %v652 = vsub.s32 %v649, %v651
        %v653 = vrot.slane %v461, %v652
        %v654 = vcombine.high %v653, %v653
        %v656 = vunpack.c.l.s4 1966171168
        %v657 = vunpack.c.0.s8 %v656
        %v658 = vlaneseq
        %v659 = vshrl.u32 %v658, 7
        %v660 = vsub.s32 %v657, %v659
        %v661 = vrot.slane %v653, %v660
        %v663 = vunpack.c.l.s4 1966171168
        %v664 = vunpack.c.0.s8 %v663
        %v665 = vlaneseq
        %v666 = vshrl.u32 %v665, 7
        %v667 = vsub.s32 %v664, %v666
        %v668 = vrot.slane %v654, %v667
        %669 = vrot.lane.b32.xlu0 %v668, 16
        %v670 = vpop.permute.xlu0 %669
        %672 = vst.msk [vmem:[#allocation2 + $0x2] sm:$0x1] %vm495, %v670
        %v673 = vcombine.high %v661, %v661
        %674 = vrot.lane.b32.xlu0 %v673, 32
        %v675 = vpop.permute.xlu0 %674
        %677 = vst.msk [vmem:[#allocation2 + $0x2] sm:$0x1] %vm503, %v675
        %v678 = vcombine.high %v668, %v668
        %679 = vrot.lane.b32.xlu0 %v678, 48
        %v680 = vpop.permute.xlu0 %679
        %682 = vst.msk [vmem:[#allocation2 + $0x2] sm:$0x1] %vm511, %v680
        %v683 = vld [vmem:[#allocation2] sm:$0x7]
        %v684 = vld [vmem:[%s3] sm:$0xff]
        %v685 = vld [vmem:[%s3 + $0x8] sm:$0xff]
        %v686 = vld [vmem:[%s3 + $0x10] sm:$0xff]
        %v687 = vld [vmem:[%s3 + $0x18] sm:$0xff]
        %v688 = vld [vmem:[%s3 + $0x20] sm:$0xff]
        %v689 = vld [vmem:[%s3 + $0x28] sm:$0xff]
        %v690 = vld [vmem:[%s3 + $0x30] sm:$0xff]
        %v691 = vld [vmem:[%s3 + $0x38] sm:$0xff]
        %v692 = vld [vmem:[%s3 + $0x40] sm:$0xff]
        %v693 = vld [vmem:[%s3 + $0x48] sm:$0xff]
        %v694 = vld [vmem:[%s3 + $0x50] sm:$0xff]
        %v695 = vld [vmem:[%s3 + $0x58] sm:$0xff]
        %v696 = vld [vmem:[%s3 + $0x60] sm:$0xff]
        %v697 = vld [vmem:[%s3 + $0x68] sm:$0xff]
        %v698 = vld [vmem:[%s3 + $0x70] sm:$0xff]
        %v699 = vld [vmem:[%s3 + $0x78] sm:$0xff]
        %v700 = vld [vmem:[%s3 + $0x80] sm:$0xff]
        %v701 = vld [vmem:[%s3 + $0x88] sm:$0xff]
        %v702 = vld [vmem:[%s3 + $0x90] sm:$0xff]
        %v703 = vld [vmem:[%s3 + $0x98] sm:$0xff]
        %v704 = vld [vmem:[%s3 + $0xa0] sm:$0xff]
        %v705 = vld [vmem:[%s3 + $0xa8] sm:$0xff]
        %v706 = vld [vmem:[%s3 + $0xb0] sm:$0xff]
        %v707 = vld [vmem:[%s3 + $0xb8] sm:$0xff]
        %v708 = vld [vmem:[%s3 + $0xc0] sm:$0xff]
        %v709 = vld [vmem:[%s3 + $0xc8] sm:$0xff]
        %v710 = vld [vmem:[%s3 + $0xd0] sm:$0xff]
        %v711 = vld [vmem:[%s3 + $0xd8] sm:$0xff]
        %v712 = vld [vmem:[%s3 + $0xe0] sm:$0xff]
        %v713 = vld [vmem:[%s3 + $0xe8] sm:$0xff]
        %v714 = vld [vmem:[%s3 + $0xf0] sm:$0xff]
        %v715 = vld [vmem:[%s3 + $0xf8] sm:$0xff]
        %v716 = vld [vmem:[%s3 + $0x100] sm:$0xff]
        %v717 = vld [vmem:[%s3 + $0x108] sm:$0xff]
        %v718 = vld [vmem:[%s3 + $0x110] sm:$0xff]
        %v719 = vld [vmem:[%s3 + $0x118] sm:$0xff]
        %v720 = vld [vmem:[%s3 + $0x120] sm:$0xff]
        %v721 = vld [vmem:[%s3 + $0x128] sm:$0xff]
        %v722 = vld [vmem:[%s3 + $0x130] sm:$0xff]
        %v723 = vld [vmem:[%s3 + $0x138] sm:$0xff]
        %v724 = vld [vmem:[%s4] sm:$0x1]
        %v726 = vlaneseq
        %v727 = vshrl.u32 %v726, 7
        %v728 = vsub.s32 0, %v727
        %v729 = vrot.slane %v683, %v728
        %v730 = vlaneseq
        %v731 = vshrl.u32 %v730, 7
        %v732 = vsub.s32 1, %v731
        %v733 = vrot.slane %v683, %v732
        %v734 = vlaneseq
        %v735 = vshrl.u32 %v734, 7
        %v736 = vsub.s32 2, %v735
        %v737 = vrot.slane %v683, %v736
        %vm740 = vcmask 523264
        %v741 = vsel %vm740, %v737, 0
        %743 = vmatprep.subr.mxu0 0.0
        %744 = vmatpush1.msra.mxu0 %v684
        %745 = vmatprep.subr.mxu0 0.0
        %746 = vmatpush1.msra.mxu0 %v685
        %747 = vmatprep.subr.mxu0 0.0
        %748 = vmatpush1.msra.mxu0 %v686
        %749 = vmatprep.subr.mxu0 0.0
        %750 = vmatpush1.msra.mxu0 %v687
        %751 = vmatprep.subr.mxu0 0.0
        %752 = vmatpush1.msra.mxu0 %v688
        %753 = vmatprep.subr.mxu0 0.0
        %754 = vmatpush1.msra.mxu0 %v689
        %755 = vmatprep.subr.mxu0 0.0
        %756 = vmatpush1.msra.mxu0 %v690
        %757 = vmatprep.subr.mxu0 0.0
        %758 = vmatpush1.msra.mxu0 %v691
        %759 = vmatprep.subr.mxu0 0.0
        %760 = vmatpush1.msra.mxu0 %v692
        %761 = vmatprep.subr.mxu0 0.0
        %762 = vmatpush1.msra.mxu0 %v693
        %763 = vmatprep.subr.mxu0 0.0
        %764 = vmatpush1.msra.mxu0 %v694
        %765 = vmatprep.subr.mxu0 0.0
        %766 = vmatpush1.msra.mxu0 %v695
        %767 = vmatprep.subr.mxu0 0.0
        %768 = vmatpush1.msra.mxu0 %v696
        %769 = vmatprep.subr.mxu0 0.0
        %770 = vmatpush1.msra.mxu0 %v697
        %771 = vmatprep.subr.mxu0 0.0
        %772 = vmatpush1.msra.mxu0 %v698
        %773 = vmatprep.subr.mxu0 0.0
        %774 = vmatpush1.msra.mxu0 %v699
        %775 = vmatprep.subr.mxu0 0.0
        %776 = vmatpush1.msra.mxu0 %v700
        %777 = vmatprep.subr.mxu0 0.0
        %778 = vmatpush1.msra.mxu0 %v701
        %779 = vmatprep.subr.mxu0 0.0
        %780 = vmatpush1.msra.mxu0 %v702
        %781 = vmatprep.subr.mxu0 0.0
        %782 = vmatpush1.msra.mxu0 %v703
        %783 = vmatprep.subr.mxu0 0.0
        %784 = vmatpush1.msra.mxu0 %v704
        %785 = vmatprep.subr.mxu0 0.0
        %786 = vmatpush1.msra.mxu0 %v705
        %787 = vmatprep.subr.mxu0 0.0
        %788 = vmatpush1.msra.mxu0 %v706
        %789 = vmatprep.subr.mxu0 0.0
        %790 = vmatpush1.msra.mxu0 %v707
        %791 = vmatprep.subr.mxu0 0.0
        %792 = vmatpush1.msra.mxu0 %v708
        %793 = vmatprep.subr.mxu0 0.0
        %794 = vmatpush1.msra.mxu0 %v709
        %795 = vmatprep.subr.mxu0 0.0
        %796 = vmatpush1.msra.mxu0 %v710
        %797 = vmatprep.subr.mxu0 0.0
        %798 = vmatpush1.msra.mxu0 %v711
        %799 = vmatprep.subr.mxu0 0.0
        %800 = vmatpush1.msra.mxu0 %v712
        %801 = vmatprep.subr.mxu0 0.0
        %802 = vmatpush1.msra.mxu0 %v713
        %803 = vmatprep.subr.mxu0 0.0
        %804 = vmatpush1.msra.mxu0 %v714
        %805 = vmatprep.subr.mxu0 0.0
        %806 = vmatpush1.msra.mxu0 %v715
        %807 = vmatprep.mubr.f32.mxu0 %v733
        %808 = vmatmul.mubr.f32.gmra.mrb[0].mxu0 %v729
        %v809 = vpop.f32.mrb[0].mxu0
        %v810 = vadd.f32 %v724, %v809
        %v811 = vpop.f32.mrb[0].mxu0
        %812 = vdwg.mxu0
        %813 = vmatprep.subr.mxu0 0.0
        %814 = vmatpush1.msra.mxu0 %v716
        %815 = vmatprep.subr.mxu0 0.0
        %816 = vmatpush1.msra.mxu0 %v717
        %817 = vmatprep.subr.mxu0 0.0
        %818 = vmatpush1.msra.mxu0 %v718
        %819 = vmatprep.subr.mxu0 0.0
        %820 = vmatpush1.msra.mxu0 %v719
        %821 = vmatprep.subr.mxu0 0.0
        %822 = vmatpush1.msra.mxu0 %v720
        %823 = vmatprep.subr.mxu0 0.0
        %824 = vmatpush1.msra.mxu0 %v721
        %825 = vmatprep.subr.mxu0 0.0
        %826 = vmatpush1.msra.mxu0 %v722
        %827 = vmatprep.subr.mxu0 0.0
        %828 = vmatpush1.msra.mxu0 %v723
        %829 = vmatprep.subr.mxu0 0.0
        %830 = vmatpush1.msra.mxu0 0.0
        %831 = vmatprep.subr.mxu0 0.0
        %832 = vmatpush1.msra.mxu0 0.0
        %833 = vmatprep.subr.mxu0 0.0
        %834 = vmatpush1.msra.mxu0 0.0
        %835 = vmatprep.subr.mxu0 0.0
        %836 = vmatpush1.msra.mxu0 0.0
        %837 = vmatprep.subr.mxu0 0.0
        %838 = vmatpush1.msra.mxu0 0.0
        %839 = vmatprep.subr.mxu0 0.0
        %840 = vmatpush1.msra.mxu0 0.0
        %841 = vmatprep.subr.mxu0 0.0
        %842 = vmatpush1.msra.mxu0 0.0
        %843 = vmatprep.subr.mxu0 0.0
        %844 = vmatpush1.msra.mxu0 0.0
        %845 = vmatprep.subr.mxu0 0.0
        %846 = vmatpush1.msra.mxu0 0.0
        %847 = vmatprep.subr.mxu0 0.0
        %848 = vmatpush1.msra.mxu0 0.0
        %849 = vmatprep.subr.mxu0 0.0
        %850 = vmatpush1.msra.mxu0 0.0
        %851 = vmatprep.subr.mxu0 0.0
        %852 = vmatpush1.msra.mxu0 0.0
        %853 = vmatprep.subr.mxu0 0.0
        %854 = vmatpush1.msra.mxu0 0.0
        %855 = vmatprep.subr.mxu0 0.0
        %856 = vmatpush1.msra.mxu0 0.0
        %857 = vmatprep.subr.mxu0 0.0
        %858 = vmatpush1.msra.mxu0 0.0
        %859 = vmatprep.subr.mxu0 0.0
        %860 = vmatpush1.msra.mxu0 0.0
        %861 = vmatprep.subr.mxu0 0.0
        %862 = vmatpush1.msra.mxu0 0.0
        %863 = vmatprep.subr.mxu0 0.0
        %864 = vmatpush1.msra.mxu0 0.0
        %865 = vmatprep.subr.mxu0 0.0
        %866 = vmatpush1.msra.mxu0 0.0
        %867 = vmatprep.subr.mxu0 0.0
        %868 = vmatpush1.msra.mxu0 0.0
        %869 = vmatprep.subr.mxu0 0.0
        %870 = vmatpush1.msra.mxu0 0.0
        %871 = vmatprep.subr.mxu0 0.0
        %872 = vmatpush1.msra.mxu0 0.0
        %873 = vmatprep.subr.mxu0 0.0
        %874 = vmatpush1.msra.mxu0 0.0
        %875 = vmatprep.subr.mxu0 0.0
        %876 = vmatpush1.msra.mxu0 0.0
        %877 = vmatprep.mubr.f32.mxu0 0.0
        %878 = vmatmul.mubr.f32.gmra.mrb[0].mxu0 %v741
        %v879 = vpop.f32.mrb[0].mxu0
        %v880 = vadd.f32 %v810, %v879
        %v881 = vpop.f32.mrb[0].mxu0
        %882 = vdwg.mxu0
        %v883 = vmax.f32 %v880, 0.0
        %v884 = vld [vmem:[%s5] sm:$0xff]
        %v885 = vld [vmem:[%s5 + $0x8] sm:$0xff]
        %v886 = vld [vmem:[%s5 + $0x10] sm:$0xff]
        %v887 = vld [vmem:[%s5 + $0x18] sm:$0xff]
        %v888 = vld [vmem:[%s5 + $0x20] sm:$0xff]
        %v889 = vld [vmem:[%s5 + $0x28] sm:$0xff]
        %v890 = vld [vmem:[%s5 + $0x30] sm:$0x3]
        %v891 = vld [vmem:[%s6] sm:$0x1]
        %vm892 = vcmask 408576
        %v894 = vsel %vm892, %v883, 0
        %v897 = vsel %vm324, %v890, 0
        %899 = vmatprep.subr.mxu0 0.0
        %900 = vmatpush1.msra.mxu0 %v884
        %901 = vmatprep.subr.mxu0 0.0
        %902 = vmatpush1.msra.mxu0 %v885
        %903 = vmatprep.subr.mxu0 0.0
        %904 = vmatpush1.msra.mxu0 %v886
        %905 = vmatprep.subr.mxu0 0.0
        %906 = vmatpush1.msra.mxu0 %v887
        %907 = vmatprep.subr.mxu0 0.0
        %908 = vmatpush1.msra.mxu0 %v888
        %909 = vmatprep.subr.mxu0 0.0
        %910 = vmatpush1.msra.mxu0 %v889
        %911 = vmatprep.subr.mxu0 0.0
        %912 = vmatpush1.msra.mxu0 %v897
        %913 = vmatprep.subr.mxu0 0.0
        %914 = vmatpush1.msra.mxu0 0.0
        %915 = vmatprep.subr.mxu0 0.0
        %916 = vmatpush1.msra.mxu0 0.0
        %917 = vmatprep.subr.mxu0 0.0
        %918 = vmatpush1.msra.mxu0 0.0
        %919 = vmatprep.subr.mxu0 0.0
        %920 = vmatpush1.msra.mxu0 0.0
        %921 = vmatprep.subr.mxu0 0.0
        %922 = vmatpush1.msra.mxu0 0.0
        %923 = vmatprep.subr.mxu0 0.0
        %924 = vmatpush1.msra.mxu0 0.0
        %925 = vmatprep.subr.mxu0 0.0
        %926 = vmatpush1.msra.mxu0 0.0
        %927 = vmatprep.subr.mxu0 0.0
        %928 = vmatpush1.msra.mxu0 0.0
        %929 = vmatprep.subr.mxu0 0.0
        %930 = vmatpush1.msra.mxu0 0.0
        %931 = vmatprep.subr.mxu0 0.0
        %932 = vmatpush1.msra.mxu0 0.0
        %933 = vmatprep.subr.mxu0 0.0
        %934 = vmatpush1.msra.mxu0 0.0
        %935 = vmatprep.subr.mxu0 0.0
        %936 = vmatpush1.msra.mxu0 0.0
        %937 = vmatprep.subr.mxu0 0.0
        %938 = vmatpush1.msra.mxu0 0.0
        %939 = vmatprep.subr.mxu0 0.0
        %940 = vmatpush1.msra.mxu0 0.0
        %941 = vmatprep.subr.mxu0 0.0
        %942 = vmatpush1.msra.mxu0 0.0
        %943 = vmatprep.subr.mxu0 0.0
        %944 = vmatpush1.msra.mxu0 0.0
        %945 = vmatprep.subr.mxu0 0.0
        %946 = vmatpush1.msra.mxu0 0.0
        %947 = vmatprep.subr.mxu0 0.0
        %948 = vmatpush1.msra.mxu0 0.0
        %949 = vmatprep.subr.mxu0 0.0
        %950 = vmatpush1.msra.mxu0 0.0
        %951 = vmatprep.subr.mxu0 0.0
        %952 = vmatpush1.msra.mxu0 0.0
        %953 = vmatprep.subr.mxu0 0.0
        %954 = vmatpush1.msra.mxu0 0.0
        %955 = vmatprep.subr.mxu0 0.0
        %956 = vmatpush1.msra.mxu0 0.0
        %957 = vmatprep.subr.mxu0 0.0
        %958 = vmatpush1.msra.mxu0 0.0
        %959 = vmatprep.subr.mxu0 0.0
        %960 = vmatpush1.msra.mxu0 0.0
        %961 = vmatprep.subr.mxu0 0.0
        %962 = vmatpush1.msra.mxu0 0.0
        %963 = vmatprep.mubr.f32.mxu0 0.0
        %964 = vmatmul.mubr.f32.gmra.mrb[0].mxu0 %v894
        %v965 = vpop.f32.mrb[0].mxu0
        %v966 = vadd.f32 %v891, %v965
        %v967 = vpop.f32.mrb[0].mxu0
        %968 = vdwg.mxu0
        %vm969 = vcmask 73728
        %v970 = vsel %vm969, %v966, -inf
        %971 = vmax.xlane.f32.xlu0 %v970
        %v972 = vpop.xlane.xlu0 %971
        %v973 = vsub.f32 %v966, %v972
        %v974 = vmul.f32 %v973, 1.442695
        %v975 = vpow.pop %v974
        %v976 = vsel %vm969, %v975, 0.0
        %977 = vadd.xlane.f32.xlu0 %v976
        %v978 = vpop.xlane.xlu0 %977
        %v979 = vlog2.pop %v978
        %v980 = vmul.f32 %v979, 0.6931472
        %v981 = vsub.f32 %v973, %v980
        %982 = vst.msk [vmem:[%s270] sm:$0x1] %vm969, %v981
        %s983 = sand.u32 %s181, 1
        %s984 = scalar_lea.sflag [#allocation4], %s983
        %s985 = sand.u32 %s181, 1
        %s986 = scalar_lea.vmem [#allocation3], %s985
        // Predicated region
        $region49: #{net_forward.3} parent=47 // pred_check
          %p987 = pneg %p191
        $region50: #{net_forward.3} parent=47 // pred_check_branch
          %989 = sbr.rel (%p987) target = $region52
        $region51: #{net_forward.3} parent=47 // pred_region
          %s991 = ssub.s32 16, 16
          %992 = vsyncadd %s984, %s991
          %s993 = smul.addr %s21, 16
          %s994 = scalar_lea.hbm %s7, %s993
          %s996 = sshll.u32 %s986, 4
          %s997 = int_to_ptr.vmem [resolvable:$true] %s996
          %999 = dma.vmem_to_hbm [thread:$0]  %s997, 16, %s994, %s984
        $region52: #{net_forward.3} parent=47 // pred_fallthru
          _
      $region48: #{net_forward.3} parent=5 // pred_fallthru
        _
      %p1000 = scmp.le.s32.totalorder 2, %s16
      // Predicated region
      $region53: #{net_forward.3} parent=5 // pred_check
        %p1001 = pneg %p1000
      $region54: #{net_forward.3} parent=5 // pred_check_branch
        %1003 = sbr.rel (%p1001) target = $region56
      $region55: #{net_forward.3} parent=5 // pred_region
        %s1004 = ssub.s32 %s16, 2
        // Predicated region
        $region57: #{net_forward.3} parent=55 // pred_check
          %p1005 = pneg %p197
        $region58: #{net_forward.3} parent=55 // pred_check_branch
          %1007 = sbr.rel (%p1005) target = $region60
        $region59: #{net_forward.3} parent=55 // pred_region
          %s1008 = sand.u32 %s182, 1
          %s1009 = scalar_lea.sflag [#allocation4], %s1008
          %s1010 = sand.u32 %s182, 1
          %s1011 = scalar_lea.vmem [#allocation3], %s1010
          %1012 = dma.done %s1009, 16
        $region60: #{net_forward.3} parent=55 // pred_fallthru
          _
      $region56: #{net_forward.3} parent=5 // pred_fallthru
        _
    $region6: #{net_forward.3} parent=1 // loop_footer
      %s20 = sadd.s32 1, %s16
    $region7: #{net_forward.3} parent=1 // loop_footer_branch
      %15 = sbr.rel target = $region3
    $region8: #{net_forward.3} parent=1 // loop_exit
      _
    %1013 = vsyncpa [#allocation4], 1
    %s1014 = scalar_lea.sflag [#allocation4], 1
    %1015 = vsyncpa %s1014, 1

</llo_original>
